<compile_context>
chip_gen: v7x
topology: tpu7x:2x2x1
jax: 0.10.0
libtpu: 0.0.40
codegen_flags: <defaults>
</compile_context>

<pallas_src>
import functools

import numpy as np
import jax
import jax.numpy as jnp
from jax.experimental import pallas as pl
from jax.experimental.pallas import tpu as pltpu


def _round8(n):
    return ((n + 7) // 8) * 8


def _round128(n):
    return ((n + 127) // 128) * 128


# ---------------------------------------------------------------------------
# Fused encoder kernel: conv blocks + 2x2 avg-pool(s) + spatial mean
# ---------------------------------------------------------------------------

def _conv_layers(A, w_ref, b_ref, m_ref, W, Mp, n_layers):
    """n_layers x (3x3 SAME conv + bias + ReLU) on A[c, p], p = i*W + j."""
    # Lane shift that brings input pixel (i+dy, j+dx) to output lane p.
    shifts = [(-(dy * W + dx)) % Mp for dy in (-1, 0, 1) for dx in (-1, 0, 1)]
    masks = [m_ref[t] for t in range(9)]          # (1, Mp) f32 border masks
    for l in range(n_layers):
        taps = []
        for t, s in enumerate(shifts):
            shifted = pltpu.roll(A, s, axis=1) if s else A   # XLU lane roll
            taps.append(shifted * masks[t])
        # im2col in VMEM: 9 taps stacked along K -> ONE MXU matmul per layer.
        stacked = jnp.concatenate(taps, axis=0)              # (9*C, Mp)
        A = jnp.maximum(
            jnp.dot(w_ref[l], stacked, preferred_element_type=jnp.float32)
            + b_ref[l],
            0.0)
    return A


def _fit_rows(A, target):
    c = A.shape[0]
    if target == c:
        return A
    if target < c:
        return A[:target, :]
    return jnp.concatenate(
        [A, jnp.zeros((target - c, A.shape[1]), A.dtype)], axis=0)


def _encoder_kernel(*refs, cfg):
    nb = len(cfg)
    x_ref = refs[0]
    blk_refs = refs[1:1 + 3 * nb]             # (w, b, mask) per block
    pool_refs = refs[1 + 3 * nb:-1]           # pooling matrix per transition
    o_ref = refs[-1]

    A = x_ref[0]                              # (C0, Mp0) f32
    for i, blk in enumerate(cfg):
        if i:
            # AvgPool2d(2, 2, ceil_mode=True) as one matmul with a constant
            # 0 / 0.25 matrix (activations never leave VMEM between blocks).
            A = jnp.dot(A, pool_refs[i - 1][...],
                        preferred_element_type=jnp.float32)
            A = _fit_rows(A, blk["C"])
        w_ref, b_ref, m_ref = blk_refs[3 * i:3 * i + 3]
        A = _conv_layers(A, w_ref, b_ref, m_ref,
                         blk["W"], blk["Mp"], blk["n"])
    # torch.mean over dim H then dim W == mean over all real H*W pixels.
    last = cfg[-1]
    o_ref[0] = jnp.mean(A[:, :last["M"]], axis=1, keepdims=True)   # (C_last, 1)


def _tap_masks(H, W, Mp):
    """Static (9, 1, Mp) {0,1} masks: is input pixel (i+dy, j+dx) in-bounds."""
    p = np.arange(Mp)
    row, col = p // W, p % W
    inside = p < H * W
    m = np.zeros((9, 1, Mp), np.float32)
    t = 0
    for dy in (-1, 0, 1):
        for dx in (-1, 0, 1):
            ok = (inside & (row + dy >= 0) & (row + dy < H)
                  & (col + dx >= 0) & (col + dx < W))
            m[t, 0, :] = ok
            t += 1
    return jnp.asarray(m)


def _pool_matrix(prev, nxt):
    """2x2 / stride-2 AvgPool2d(ceil_mode=True) as a (Mp_prev, Mp_next) matrix."""
    P = np.zeros((prev["Mp"], nxt["Mp"]), np.float32)
    H1, W1, H2, W2 = prev["H"], prev["W"], nxt["H"], nxt["W"]
    for i2 in range(H2):
        for j2 in range(W2):
            src = [(2 * i2 + a) * W1 + (2 * j2 + b)
                   for a in range(2) for b in range(2)
                   if 2 * i2 + a < H1 and 2 * j2 + b < W1]
            for s in src:
                P[s, i2 * W2 + j2] = 1.0 / len(src)
    return jnp.asarray(P)


def encoder_forward(x, blocks):
    """Encoder.forward fused with the spatial mean of AxisAlignedConvGaussian.

    x: (B, Cin, H, W) f32 (NCHW, matching the PyTorch reference).
    blocks: [(w_pack (n, Cb, 9*Cb), b_pack (n, Cb, 1)), ...]
    Returns pooled features (B, Cb_last) f32 (channels >= num_filters[-1] are 0).
    """
    B, cin, H, W = x.shape

    # Static per-block geometry derived from input / packed-weight shapes.
    cfg = []
    h_i, w_i = H, W
    for i, (wp, _) in enumerate(blocks):
        if i:
            h_i, w_i = -(-h_i // 2), -(-w_i // 2)        # ceil_mode pooling
        M = h_i * w_i
        cfg.append(dict(H=h_i, W=w_i, M=M, Mp=_round128(M),
                        C=int(wp.shape[1]), n=int(wp.shape[0])))
    cfg = tuple(cfg)

    # Pack the input: NCHW -> (B, C0_pad, Mp0) channel-major / spatial-flat.
    c0, mp0 = cfg[0]["C"], cfg[0]["Mp"]
    xf = x.reshape(B, cin, H * W)
    xf = jnp.pad(xf, ((0, 0), (0, c0 - cin), (0, mp0 - H * W)))

    operands = [xf]
    in_specs = [pl.BlockSpec((1, c0, mp0), lambda b: (b, 0, 0))]
    for i, (wp, bp) in enumerate(blocks):
        mk = _tap_masks(cfg[i]["H"], cfg[i]["W"], cfg[i]["Mp"])
        for arr in (wp, bp, mk):
            operands.append(arr)
            in_specs.append(pl.BlockSpec(arr.shape,
                                         lambda b, _nd=arr.ndim: (0,) * _nd))
    for i in range(len(blocks) - 1):
        P = _pool_matrix(cfg[i], cfg[i + 1])
        operands.append(P)
        in_specs.append(pl.BlockSpec(P.shape, lambda b: (0, 0)))

    c_last = cfg[-1]["C"]
    out = pl.pallas_call(
        functools.partial(_encoder_kernel, cfg=cfg),
        out_shape=jax.ShapeDtypeStruct((B, c_last, 1), jnp.float32),
        grid=(B,),
        in_specs=in_specs,
        out_specs=pl.BlockSpec((1, c_last, 1), lambda b: (b, 0, 0)),
        compiler_params=pltpu.CompilerParams(
            dimension_semantics=("parallel",),   # v7x: shard batch over 2 TCs
            vmem_limit_bytes=32 * 1024 * 1024,
        ),
    )(*operands)
    return out.reshape(B, c_last)


# ---------------------------------------------------------------------------
# AxisAlignedConvGaussian (plain-JAX glue around the fused encoder kernel)
# ---------------------------------------------------------------------------

def axis_aligned_gaussian_forward(patch, segm, params, latent_dim):
    """AxisAlignedConvGaussian.forward (posterior=True): (h, mu, log_sigma)."""
    inp = jnp.concatenate([patch, segm], axis=1)       # cat along channel (NCHW)
    pooled = encoder_forward(inp, params["enc_blocks"])
    cf = params["head_w"].shape[0]
    h = pooled[:, :cf]
    mls = h @ params["head_w"] + params["head_b"]      # 1x1 conv on 1x1 spatial
    return h, mls[:, :latent_dim], mls[:, latent_dim:]


# ---------------------------------------------------------------------------
# Flow steps (tiny latent-dim ops; plain JAX)
# ---------------------------------------------------------------------------

def _cond_act_norm(z, s, t):
    # TODO(synk): CondActNorm source not provided; standard conditional actnorm.
    return z * jnp.exp(s) + t, jnp.sum(s, axis=-1)


def _cond_invertible_1x1(z, W):
    # TODO(synk): CondInvertible1x1Conv source not provided; z @ W with log|det W|.
    return jnp.einsum("bi,bij->bj", z, W), jnp.linalg.slogdet(W)[1]


def _cond_affine_half_flow(z, h, p, parity):
    # TODO(synk): CondAffineHalfFlow source not provided; standard parity-split
    # affine coupling with MLP(nh=4) conditioners on [z_half, h].
    z0, z1 = z[:, ::2], z[:, 1::2]
    if parity:
        z0, z1 = z1, z0
    inp = jnp.concatenate([z0, h], axis=-1)
    s = jnp.maximum(inp @ p["s_w1"] + p["s_b1"], 0.0) @ p["s_w2"] + p["s_b2"]
    t = jnp.maximum(inp @ p["t_w1"] + p["t_b1"], 0.0) @ p["t_w2"] + p["t_b2"]
    z1 = z1 * jnp.exp(s) + t
    if parity:
        z0, z1 = z1, z0
    return jnp.concatenate([z0, z1], axis=-1), jnp.sum(s, axis=-1)


# ---------------------------------------------------------------------------
# glowDensity forward
# ---------------------------------------------------------------------------

def glow_density_forward(patch, segm, params, sample_key, *, latent_dim, num_flows):
    B = patch.shape[0]
    h, mu, log_sigma = axis_aligned_gaussian_forward(
        patch, segm, params["base"], latent_dim)

    eps = jax.random.normal(sample_key, mu.shape, jnp.float32)
    z0 = mu + jnp.exp(log_sigma) * eps                 # z0_density.rsample()

    a = params["amor"]
    hid = jnp.maximum(h @ a["W1"] + a["b1"], 0.0)      # amor_W: Linear-ReLU-Linear
    Wmat = (hid @ a["W2"] + a["b2"]).reshape(B, num_flows, latent_dim, latent_dim)
    s = (h @ a["sW"] + a["sb"]).reshape(B, num_flows, latent_dim)
    t = (h @ a["tW"] + a["tb"]).reshape(B, num_flows, 1)

    ldj = jnp.zeros((B,), jnp.float32)
    z = z0
    for k in range(num_flows):
        z, d = _cond_act_norm(z, s[:, k, :], t[:, k, :]);        ldj = ldj + d
        z, d = _cond_invertible_1x1(z, Wmat[:, k]);              ldj = ldj + d
        z, d = _cond_affine_half_flow(z, h, params["couplings"][k], k % 2)
        ldj = ldj + d

    return {"log_det_j": ldj, "z0": z0, "zk": z,
            "mu": mu, "log_sigma": log_sigma, "h": h}


# ---------------------------------------------------------------------------
# Parameter construction (deterministic) + kernel weight packing
# ---------------------------------------------------------------------------

def _conv_param(key, kh, kw, cin, cout):
    kw_key, kb_key = jax.random.split(key)
    std = (2.0 / (kh * kw * cin)) ** 0.5
    w = jax.random.normal(kw_key, (kh, kw, cin, cout), jnp.float32) * std
    b = jax.random.normal(kb_key, (cout,), jnp.float32) * 0.01
    return w, b


def _linear_param(key, fan_in, fan_out, bias_scale=0.01):
    kw_key, kb_key = jax.random.split(key)
    std = (2.0 / fan_in) ** 0.5
    w = jax.random.normal(kw_key, (fan_in, fan_out), jnp.float32) * std
    b = jax.random.normal(kb_key, (fan_out,), jnp.float32) * bias_scale
    return w, b


def make_encoder_params(key, in_ch, num_filters, no_convs_per_block):
    """Per block: conv weights packed tap-major along K as (n, Cb, 9*Cb) f32
    (so each conv layer is a single matmul in the kernel) + (n, Cb, 1) bias."""
    blocks = []
    cin = in_ch
    for nf in num_filters:
        Cb = _round8(max(cin, nf))
        wp = jnp.zeros((no_convs_per_block, Cb, 9 * Cb), jnp.float32)
        bp = jnp.zeros((no_convs_per_block, Cb, 1), jnp.float32)
        lcin = cin
        for l in range(no_convs_per_block):
            key, sub = jax.random.split(key)
            w, b = _conv_param(sub, 3, 3, lcin, nf)               # HWIO
            wt = jnp.transpose(w.reshape(9, lcin, nf), (2, 0, 1))  # (nf, 9, lcin)
            wt = jnp.pad(wt, ((0, Cb - nf), (0, 0), (0, Cb - lcin)))
            wp = wp.at[l].set(wt.reshape(Cb, 9 * Cb))
            bp = bp.at[l, :nf, 0].set(b)
            lcin = nf
        blocks.append((wp, bp))
        cin = nf
    return blocks


def make_glow_density_params(key, input_channels, num_classes, num_filters,
                             no_convs_per_block, latent_dim, num_flows):
    cf = num_filters[-1]
    keys = jax.random.split(key, 8 + num_flows)
    enc_blocks = make_encoder_params(
        keys[0], input_channels + num_classes, num_filters, no_convs_per_block)
    head_w, head_b = _linear_param(keys[1], cf, 2 * latent_dim, bias_scale=1.0)
    W1, b1 = _linear_param(keys[2], cf, 4)
    W2, b2 = _linear_param(keys[3], 4, num_flows * latent_dim * latent_dim)
    sW, sb = _linear_param(keys[4], cf, num_flows * latent_dim)
    tW, tb = _linear_param(keys[5], cf, num_flows)
    couplings = []
    half = latent_dim // 2
    nh = 4
    for k in range(num_flows):
        ck = jax.random.split(keys[8 + k], 4)
        s_w1, s_b1 = _linear_param(ck[0], half + cf, nh)
        s_w2, s_b2 = _linear_param(ck[1], nh, latent_dim - half)
        t_w1, t_b1 = _linear_param(ck[2], half + cf, nh)
        t_w2, t_b2 = _linear_param(ck[3], nh, latent_dim - half)
        couplings.append(dict(s_w1=s_w1, s_b1=s_b1, s_w2=s_w2, s_b2=s_b2,
                              t_w1=t_w1, t_b1=t_b1, t_w2=t_w2, t_b2=t_b2))
    return {
        "base": {"enc_blocks": enc_blocks, "head_w": head_w, "head_b": head_b},
        "amor": {"W1": W1, "b1": b1, "W2": W2, "b2": b2,
                 "sW": sW, "sb": sb, "tW": tW, "tb": tb},
        "couplings": couplings,
    }


# ---------------------------------------------------------------------------
# Main
# ---------------------------------------------------------------------------

if __name__ == "__main__":
    input_channels = 1
    num_classes = 1
    num_filters = [8, 16]
    latent_dim = 6
    no_convs_per_block = 3
    num_flows = 2
    B, H, W = 2, 16, 16

    root = jax.random.PRNGKey(0)
    k_patch, k_segm, k_params, k_sample = jax.random.split(root, 4)

    # NCHW inputs, matching the PyTorch reference layout.
    patch = jax.random.normal(k_patch, (B, input_channels, H, W), jnp.float32)
    segm = jax.random.normal(k_segm, (B, num_classes, H, W), jnp.float32)

    params = make_glow_density_params(
        k_params, input_channels, num_classes, num_filters,
        no_convs_per_block, latent_dim, num_flows)

    fwd = jax.jit(functools.partial(
        glow_density_forward, latent_dim=latent_dim, num_flows=num_flows))
    out = fwd(patch, segm, params, k_sample)
    out = jax.block_until_ready(out)

    assert out["z0"].shape == (B, latent_dim)
    assert out["zk"].shape == (B, latent_dim)
    assert out["log_det_j"].shape == (B,)
    assert out["mu"].shape == (B, latent_dim)
    assert out["log_sigma"].shape == (B, latent_dim)
    assert out["h"].shape == (B, num_filters[-1])
    assert bool(jnp.all(jnp.isfinite(out["zk"])))
    print("KERNEL_OK")
</pallas_src>

<mosaic_0001>
module attributes {stable_mosaic.version = 11 : i64} {
  func.func @_encoder_kernel(%arg0: i32, %arg1: memref<1x8x256xf32, #tpu.memory_space<vmem>>, %arg2: memref<3x8x72xf32, #tpu.memory_space<vmem>>, %arg3: memref<3x8x1xf32, #tpu.memory_space<vmem>>, %arg4: memref<9x1x256xf32, #tpu.memory_space<vmem>>, %arg5: memref<3x16x144xf32, #tpu.memory_space<vmem>>, %arg6: memref<3x16x1xf32, #tpu.memory_space<vmem>>, %arg7: memref<9x1x128xf32, #tpu.memory_space<vmem>>, %arg8: memref<256x128xf32, #tpu.memory_space<vmem>>, %arg9: memref<1x16x1xf32, #tpu.memory_space<vmem>>) attributes {dimension_semantics = [#tpu.dimension_semantics<parallel>], iteration_bounds = array<i64: 2>, scalar_prefetch = 0 : i64, scratch_operands = 0 : i64, tpu.core_type = #tpu.core_type<tc>, window_params = [{transform_indices = @transform_0, window_bounds = array<i64: 1, 8, 256>}, {pipeline_mode = #tpu.pipeline_mode<synchronous>, transform_indices = @transform_1, window_bounds = array<i64: 3, 8, 72>}, {pipeline_mode = #tpu.pipeline_mode<synchronous>, transform_indices = @transform_2, window_bounds = array<i64: 3, 8, 1>}, {pipeline_mode = #tpu.pipeline_mode<synchronous>, transform_indices = @transform_3, window_bounds = array<i64: 9, 1, 256>}, {pipeline_mode = #tpu.pipeline_mode<synchronous>, transform_indices = @transform_4, window_bounds = array<i64: 3, 16, 144>}, {pipeline_mode = #tpu.pipeline_mode<synchronous>, transform_indices = @transform_5, window_bounds = array<i64: 3, 16, 1>}, {pipeline_mode = #tpu.pipeline_mode<synchronous>, transform_indices = @transform_6, window_bounds = array<i64: 9, 1, 128>}, {pipeline_mode = #tpu.pipeline_mode<synchronous>, transform_indices = @transform_7, window_bounds = array<i64: 256, 128>}, {transform_indices = @transform_8, window_bounds = array<i64: 1, 16, 1>}]} {
    %c0 = arith.constant 0 : index
    %c0_0 = arith.constant 0 : index
    %c0_1 = arith.constant 0 : index
    %0 = vector.load %arg1[%c0, %c0_0, %c0_1] : memref<1x8x256xf32, #tpu.memory_space<vmem>>, vector<1x8x256xf32>
    %1 = vector.shape_cast %0 : vector<1x8x256xf32> to vector<8x256xf32>
    %c0_2 = arith.constant 0 : index
    %c0_3 = arith.constant 0 : index
    %c0_4 = arith.constant 0 : index
    %2 = vector.load %arg4[%c0_2, %c0_3, %c0_4] : memref<9x1x256xf32, #tpu.memory_space<vmem>>, vector<1x1x256xf32>
    %3 = vector.shape_cast %2 : vector<1x1x256xf32> to vector<1x256xf32>
    %c1 = arith.constant 1 : index
    %c0_5 = arith.constant 0 : index
    %c0_6 = arith.constant 0 : index
    %4 = vector.load %arg4[%c1, %c0_5, %c0_6] : memref<9x1x256xf32, #tpu.memory_space<vmem>>, vector<1x1x256xf32>
    %5 = vector.shape_cast %4 : vector<1x1x256xf32> to vector<1x256xf32>
    %c2 = arith.constant 2 : index
    %c0_7 = arith.constant 0 : index
    %c0_8 = arith.constant 0 : index
    %6 = vector.load %arg4[%c2, %c0_7, %c0_8] : memref<9x1x256xf32, #tpu.memory_space<vmem>>, vector<1x1x256xf32>
    %7 = vector.shape_cast %6 : vector<1x1x256xf32> to vector<1x256xf32>
    %c3 = arith.constant 3 : index
    %c0_9 = arith.constant 0 : index
    %c0_10 = arith.constant 0 : index
    %8 = vector.load %arg4[%c3, %c0_9, %c0_10] : memref<9x1x256xf32, #tpu.memory_space<vmem>>, vector<1x1x256xf32>
    %9 = vector.shape_cast %8 : vector<1x1x256xf32> to vector<1x256xf32>
    %c4 = arith.constant 4 : index
    %c0_11 = arith.constant 0 : index
    %c0_12 = arith.constant 0 : index
    %10 = vector.load %arg4[%c4, %c0_11, %c0_12] : memref<9x1x256xf32, #tpu.memory_space<vmem>>, vector<1x1x256xf32>
    %11 = vector.shape_cast %10 : vector<1x1x256xf32> to vector<1x256xf32>
    %c5 = arith.constant 5 : index
    %c0_13 = arith.constant 0 : index
    %c0_14 = arith.constant 0 : index
    %12 = vector.load %arg4[%c5, %c0_13, %c0_14] : memref<9x1x256xf32, #tpu.memory_space<vmem>>, vector<1x1x256xf32>
    %13 = vector.shape_cast %12 : vector<1x1x256xf32> to vector<1x256xf32>
    %c6 = arith.constant 6 : index
    %c0_15 = arith.constant 0 : index
    %c0_16 = arith.constant 0 : index
    %14 = vector.load %arg4[%c6, %c0_15, %c0_16] : memref<9x1x256xf32, #tpu.memory_space<vmem>>, vector<1x1x256xf32>
    %15 = vector.shape_cast %14 : vector<1x1x256xf32> to vector<1x256xf32>
    %c7 = arith.constant 7 : index
    %c0_17 = arith.constant 0 : index
    %c0_18 = arith.constant 0 : index
    %16 = vector.load %arg4[%c7, %c0_17, %c0_18] : memref<9x1x256xf32, #tpu.memory_space<vmem>>, vector<1x1x256xf32>
    %17 = vector.shape_cast %16 : vector<1x1x256xf32> to vector<1x256xf32>
    %c8 = arith.constant 8 : index
    %c0_19 = arith.constant 0 : index
    %c0_20 = arith.constant 0 : index
    %18 = vector.load %arg4[%c8, %c0_19, %c0_20] : memref<9x1x256xf32, #tpu.memory_space<vmem>>, vector<1x1x256xf32>
    %19 = vector.shape_cast %18 : vector<1x1x256xf32> to vector<1x256xf32>
    %c17_i32 = arith.constant 17 : i32
    %20 = tpu.dynamic_rotate %1 by %c17_i32 dim 1 : vector<8x256xf32>, i32 -> vector<8x256xf32>
    %21 = vector.broadcast %3 : vector<1x256xf32> to vector<8x256xf32>
    %22 = arith.mulf %20, %21 : vector<8x256xf32>
    %c16_i32 = arith.constant 16 : i32
    %23 = tpu.dynamic_rotate %1 by %c16_i32 dim 1 : vector<8x256xf32>, i32 -> vector<8x256xf32>
    %24 = vector.broadcast %5 : vector<1x256xf32> to vector<8x256xf32>
    %25 = arith.mulf %23, %24 : vector<8x256xf32>
    %c15_i32 = arith.constant 15 : i32
    %26 = tpu.dynamic_rotate %1 by %c15_i32 dim 1 : vector<8x256xf32>, i32 -> vector<8x256xf32>
    %27 = vector.broadcast %7 : vector<1x256xf32> to vector<8x256xf32>
    %28 = arith.mulf %26, %27 : vector<8x256xf32>
    %c1_i32 = arith.constant 1 : i32
    %29 = tpu.dynamic_rotate %1 by %c1_i32 dim 1 : vector<8x256xf32>, i32 -> vector<8x256xf32>
    %30 = vector.broadcast %9 : vector<1x256xf32> to vector<8x256xf32>
    %31 = arith.mulf %29, %30 : vector<8x256xf32>
    %32 = vector.broadcast %11 : vector<1x256xf32> to vector<8x256xf32>
    %33 = arith.mulf %1, %32 : vector<8x256xf32>
    %c255_i32 = arith.constant 255 : i32
    %34 = tpu.dynamic_rotate %1 by %c255_i32 dim 1 : vector<8x256xf32>, i32 -> vector<8x256xf32>
    %35 = vector.broadcast %13 : vector<1x256xf32> to vector<8x256xf32>
    %36 = arith.mulf %34, %35 : vector<8x256xf32>
    %c241_i32 = arith.constant 241 : i32
    %37 = tpu.dynamic_rotate %1 by %c241_i32 dim 1 : vector<8x256xf32>, i32 -> vector<8x256xf32>
    %38 = vector.broadcast %15 : vector<1x256xf32> to vector<8x256xf32>
    %39 = arith.mulf %37, %38 : vector<8x256xf32>
    %c240_i32 = arith.constant 240 : i32
    %40 = tpu.dynamic_rotate %1 by %c240_i32 dim 1 : vector<8x256xf32>, i32 -> vector<8x256xf32>
    %41 = vector.broadcast %17 : vector<1x256xf32> to vector<8x256xf32>
    %42 = arith.mulf %40, %41 : vector<8x256xf32>
    %c239_i32 = arith.constant 239 : i32
    %43 = tpu.dynamic_rotate %1 by %c239_i32 dim 1 : vector<8x256xf32>, i32 -> vector<8x256xf32>
    %44 = vector.broadcast %19 : vector<1x256xf32> to vector<8x256xf32>
    %45 = arith.mulf %43, %44 : vector<8x256xf32>
    %46 = tpu.concatenate %22, %25, %28, %31, %33, %36, %39, %42, %45 in 0 : vector<8x256xf32>, vector<8x256xf32>, vector<8x256xf32>, vector<8x256xf32>, vector<8x256xf32>, vector<8x256xf32>, vector<8x256xf32>, vector<8x256xf32>, vector<8x256xf32> -> vector<72x256xf32>
    %c0_21 = arith.constant 0 : index
    %c0_22 = arith.constant 0 : index
    %c0_23 = arith.constant 0 : index
    %47 = vector.load %arg2[%c0_21, %c0_22, %c0_23] : memref<3x8x72xf32, #tpu.memory_space<vmem>>, vector<1x8x72xf32>
    %48 = vector.shape_cast %47 : vector<1x8x72xf32> to vector<8x72xf32>
    %cst = arith.constant dense<0.000000e+00> : vector<8x256xf32>
    %49 = tpu.matmul %48, %46, %cst {dimension_numbers = #tpu.dot_dimension_numbers<[1], [0], [0], [1], [0, 0, 1, 1], [], []>} : vector<8x72xf32>, vector<72x256xf32>, vector<8x256xf32> -> vector<8x256xf32>
    %c0_24 = arith.constant 0 : index
    %c0_25 = arith.constant 0 : index
    %c0_26 = arith.constant 0 : index
    %50 = vector.load %arg3[%c0_24, %c0_25, %c0_26] : memref<3x8x1xf32, #tpu.memory_space<vmem>>, vector<1x8x1xf32>
    %51 = vector.shape_cast %50 : vector<1x8x1xf32> to vector<8x1xf32>
    %52 = vector.broadcast %51 : vector<8x1xf32> to vector<8x256xf32>
    %53 = arith.addf %49, %52 : vector<8x256xf32>
    %cst_27 = arith.constant 0.000000e+00 : f32
    %54 = vector.broadcast %cst_27 : f32 to vector<8x256xf32>
    %55 = arith.maximumf %53, %54 : vector<8x256xf32>
    %c17_i32_28 = arith.constant 17 : i32
    %56 = tpu.dynamic_rotate %55 by %c17_i32_28 dim 1 : vector<8x256xf32>, i32 -> vector<8x256xf32>
    %57 = vector.broadcast %3 : vector<1x256xf32> to vector<8x256xf32>
    %58 = arith.mulf %56, %57 : vector<8x256xf32>
    %c16_i32_29 = arith.constant 16 : i32
    %59 = tpu.dynamic_rotate %55 by %c16_i32_29 dim 1 : vector<8x256xf32>, i32 -> vector<8x256xf32>
    %60 = vector.broadcast %5 : vector<1x256xf32> to vector<8x256xf32>
    %61 = arith.mulf %59, %60 : vector<8x256xf32>
    %c15_i32_30 = arith.constant 15 : i32
    %62 = tpu.dynamic_rotate %55 by %c15_i32_30 dim 1 : vector<8x256xf32>, i32 -> vector<8x256xf32>
    %63 = vector.broadcast %7 : vector<1x256xf32> to vector<8x256xf32>
    %64 = arith.mulf %62, %63 : vector<8x256xf32>
    %c1_i32_31 = arith.constant 1 : i32
    %65 = tpu.dynamic_rotate %55 by %c1_i32_31 dim 1 : vector<8x256xf32>, i32 -> vector<8x256xf32>
    %66 = vector.broadcast %9 : vector<1x256xf32> to vector<8x256xf32>
    %67 = arith.mulf %65, %66 : vector<8x256xf32>
    %68 = vector.broadcast %11 : vector<1x256xf32> to vector<8x256xf32>
    %69 = arith.mulf %55, %68 : vector<8x256xf32>
    %c255_i32_32 = arith.constant 255 : i32
    %70 = tpu.dynamic_rotate %55 by %c255_i32_32 dim 1 : vector<8x256xf32>, i32 -> vector<8x256xf32>
    %71 = vector.broadcast %13 : vector<1x256xf32> to vector<8x256xf32>
    %72 = arith.mulf %70, %71 : vector<8x256xf32>
    %c241_i32_33 = arith.constant 241 : i32
    %73 = tpu.dynamic_rotate %55 by %c241_i32_33 dim 1 : vector<8x256xf32>, i32 -> vector<8x256xf32>
    %74 = vector.broadcast %15 : vector<1x256xf32> to vector<8x256xf32>
    %75 = arith.mulf %73, %74 : vector<8x256xf32>
    %c240_i32_34 = arith.constant 240 : i32
    %76 = tpu.dynamic_rotate %55 by %c240_i32_34 dim 1 : vector<8x256xf32>, i32 -> vector<8x256xf32>
    %77 = vector.broadcast %17 : vector<1x256xf32> to vector<8x256xf32>
    %78 = arith.mulf %76, %77 : vector<8x256xf32>
    %c239_i32_35 = arith.constant 239 : i32
    %79 = tpu.dynamic_rotate %55 by %c239_i32_35 dim 1 : vector<8x256xf32>, i32 -> vector<8x256xf32>
    %80 = vector.broadcast %19 : vector<1x256xf32> to vector<8x256xf32>
    %81 = arith.mulf %79, %80 : vector<8x256xf32>
    %82 = tpu.concatenate %58, %61, %64, %67, %69, %72, %75, %78, %81 in 0 : vector<8x256xf32>, vector<8x256xf32>, vector<8x256xf32>, vector<8x256xf32>, vector<8x256xf32>, vector<8x256xf32>, vector<8x256xf32>, vector<8x256xf32>, vector<8x256xf32> -> vector<72x256xf32>
    %c1_36 = arith.constant 1 : index
    %c0_37 = arith.constant 0 : index
    %c0_38 = arith.constant 0 : index
    %83 = vector.load %arg2[%c1_36, %c0_37, %c0_38] : memref<3x8x72xf32, #tpu.memory_space<vmem>>, vector<1x8x72xf32>
    %84 = vector.shape_cast %83 : vector<1x8x72xf32> to vector<8x72xf32>
    %cst_39 = arith.constant dense<0.000000e+00> : vector<8x256xf32>
    %85 = tpu.matmul %84, %82, %cst_39 {dimension_numbers = #tpu.dot_dimension_numbers<[1], [0], [0], [1], [0, 0, 1, 1], [], []>} : vector<8x72xf32>, vector<72x256xf32>, vector<8x256xf32> -> vector<8x256xf32>
    %c1_40 = arith.constant 1 : index
    %c0_41 = arith.constant 0 : index
    %c0_42 = arith.constant 0 : index
    %86 = vector.load %arg3[%c1_40, %c0_41, %c0_42] : memref<3x8x1xf32, #tpu.memory_space<vmem>>, vector<1x8x1xf32>
    %87 = vector.shape_cast %86 : vector<1x8x1xf32> to vector<8x1xf32>
    %88 = vector.broadcast %87 : vector<8x1xf32> to vector<8x256xf32>
    %89 = arith.addf %85, %88 : vector<8x256xf32>
    %cst_43 = arith.constant 0.000000e+00 : f32
    %90 = vector.broadcast %cst_43 : f32 to vector<8x256xf32>
    %91 = arith.maximumf %89, %90 : vector<8x256xf32>
    %c17_i32_44 = arith.constant 17 : i32
    %92 = tpu.dynamic_rotate %91 by %c17_i32_44 dim 1 : vector<8x256xf32>, i32 -> vector<8x256xf32>
    %93 = vector.broadcast %3 : vector<1x256xf32> to vector<8x256xf32>
    %94 = arith.mulf %92, %93 : vector<8x256xf32>
    %c16_i32_45 = arith.constant 16 : i32
    %95 = tpu.dynamic_rotate %91 by %c16_i32_45 dim 1 : vector<8x256xf32>, i32 -> vector<8x256xf32>
    %96 = vector.broadcast %5 : vector<1x256xf32> to vector<8x256xf32>
    %97 = arith.mulf %95, %96 : vector<8x256xf32>
    %c15_i32_46 = arith.constant 15 : i32
    %98 = tpu.dynamic_rotate %91 by %c15_i32_46 dim 1 : vector<8x256xf32>, i32 -> vector<8x256xf32>
    %99 = vector.broadcast %7 : vector<1x256xf32> to vector<8x256xf32>
    %100 = arith.mulf %98, %99 : vector<8x256xf32>
    %c1_i32_47 = arith.constant 1 : i32
    %101 = tpu.dynamic_rotate %91 by %c1_i32_47 dim 1 : vector<8x256xf32>, i32 -> vector<8x256xf32>
    %102 = vector.broadcast %9 : vector<1x256xf32> to vector<8x256xf32>
    %103 = arith.mulf %101, %102 : vector<8x256xf32>
    %104 = vector.broadcast %11 : vector<1x256xf32> to vector<8x256xf32>
    %105 = arith.mulf %91, %104 : vector<8x256xf32>
    %c255_i32_48 = arith.constant 255 : i32
    %106 = tpu.dynamic_rotate %91 by %c255_i32_48 dim 1 : vector<8x256xf32>, i32 -> vector<8x256xf32>
    %107 = vector.broadcast %13 : vector<1x256xf32> to vector<8x256xf32>
    %108 = arith.mulf %106, %107 : vector<8x256xf32>
    %c241_i32_49 = arith.constant 241 : i32
    %109 = tpu.dynamic_rotate %91 by %c241_i32_49 dim 1 : vector<8x256xf32>, i32 -> vector<8x256xf32>
    %110 = vector.broadcast %15 : vector<1x256xf32> to vector<8x256xf32>
    %111 = arith.mulf %109, %110 : vector<8x256xf32>
    %c240_i32_50 = arith.constant 240 : i32
    %112 = tpu.dynamic_rotate %91 by %c240_i32_50 dim 1 : vector<8x256xf32>, i32 -> vector<8x256xf32>
    %113 = vector.broadcast %17 : vector<1x256xf32> to vector<8x256xf32>
    %114 = arith.mulf %112, %113 : vector<8x256xf32>
    %c239_i32_51 = arith.constant 239 : i32
    %115 = tpu.dynamic_rotate %91 by %c239_i32_51 dim 1 : vector<8x256xf32>, i32 -> vector<8x256xf32>
    %116 = vector.broadcast %19 : vector<1x256xf32> to vector<8x256xf32>
    %117 = arith.mulf %115, %116 : vector<8x256xf32>
    %118 = tpu.concatenate %94, %97, %100, %103, %105, %108, %111, %114, %117 in 0 : vector<8x256xf32>, vector<8x256xf32>, vector<8x256xf32>, vector<8x256xf32>, vector<8x256xf32>, vector<8x256xf32>, vector<8x256xf32>, vector<8x256xf32>, vector<8x256xf32> -> vector<72x256xf32>
    %c2_52 = arith.constant 2 : index
    %c0_53 = arith.constant 0 : index
    %c0_54 = arith.constant 0 : index
    %119 = vector.load %arg2[%c2_52, %c0_53, %c0_54] : memref<3x8x72xf32, #tpu.memory_space<vmem>>, vector<1x8x72xf32>
    %120 = vector.shape_cast %119 : vector<1x8x72xf32> to vector<8x72xf32>
    %cst_55 = arith.constant dense<0.000000e+00> : vector<8x256xf32>
    %121 = tpu.matmul %120, %118, %cst_55 {dimension_numbers = #tpu.dot_dimension_numbers<[1], [0], [0], [1], [0, 0, 1, 1], [], []>} : vector<8x72xf32>, vector<72x256xf32>, vector<8x256xf32> -> vector<8x256xf32>
    %c2_56 = arith.constant 2 : index
    %c0_57 = arith.constant 0 : index
    %c0_58 = arith.constant 0 : index
    %122 = vector.load %arg3[%c2_56, %c0_57, %c0_58] : memref<3x8x1xf32, #tpu.memory_space<vmem>>, vector<1x8x1xf32>
    %123 = vector.shape_cast %122 : vector<1x8x1xf32> to vector<8x1xf32>
    %124 = vector.broadcast %123 : vector<8x1xf32> to vector<8x256xf32>
    %125 = arith.addf %121, %124 : vector<8x256xf32>
    %cst_59 = arith.constant 0.000000e+00 : f32
    %126 = vector.broadcast %cst_59 : f32 to vector<8x256xf32>
    %127 = arith.maximumf %125, %126 : vector<8x256xf32>
    %c0_60 = arith.constant 0 : index
    %c0_61 = arith.constant 0 : index
    %128 = vector.load %arg8[%c0_60, %c0_61] : memref<256x128xf32, #tpu.memory_space<vmem>>, vector<256x128xf32>
    %cst_62 = arith.constant dense<0.000000e+00> : vector<8x128xf32>
    %129 = tpu.matmul %127, %128, %cst_62 {dimension_numbers = #tpu.dot_dimension_numbers<[1], [0], [0], [1], [0, 0, 1, 1], [], []>} : vector<8x256xf32>, vector<256x128xf32>, vector<8x128xf32> -> vector<8x128xf32>
    %cst_63 = arith.constant 0.000000e+00 : f32
    %130 = vector.broadcast %cst_63 : f32 to vector<8x128xf32>
    %131 = tpu.concatenate %129, %130 in 0 : vector<8x128xf32>, vector<8x128xf32> -> vector<16x128xf32>
    %c0_64 = arith.constant 0 : index
    %c0_65 = arith.constant 0 : index
    %c0_66 = arith.constant 0 : index
    %132 = vector.load %arg7[%c0_64, %c0_65, %c0_66] : memref<9x1x128xf32, #tpu.memory_space<vmem>>, vector<1x1x128xf32>
    %133 = vector.shape_cast %132 : vector<1x1x128xf32> to vector<1x128xf32>
    %c1_67 = arith.constant 1 : index
    %c0_68 = arith.constant 0 : index
    %c0_69 = arith.constant 0 : index
    %134 = vector.load %arg7[%c1_67, %c0_68, %c0_69] : memref<9x1x128xf32, #tpu.memory_space<vmem>>, vector<1x1x128xf32>
    %135 = vector.shape_cast %134 : vector<1x1x128xf32> to vector<1x128xf32>
    %c2_70 = arith.constant 2 : index
    %c0_71 = arith.constant 0 : index
    %c0_72 = arith.constant 0 : index
    %136 = vector.load %arg7[%c2_70, %c0_71, %c0_72] : memref<9x1x128xf32, #tpu.memory_space<vmem>>, vector<1x1x128xf32>
    %137 = vector.shape_cast %136 : vector<1x1x128xf32> to vector<1x128xf32>
    %c3_73 = arith.constant 3 : index
    %c0_74 = arith.constant 0 : index
    %c0_75 = arith.constant 0 : index
    %138 = vector.load %arg7[%c3_73, %c0_74, %c0_75] : memref<9x1x128xf32, #tpu.memory_space<vmem>>, vector<1x1x128xf32>
    %139 = vector.shape_cast %138 : vector<1x1x128xf32> to vector<1x128xf32>
    %c4_76 = arith.constant 4 : index
    %c0_77 = arith.constant 0 : index
    %c0_78 = arith.constant 0 : index
    %140 = vector.load %arg7[%c4_76, %c0_77, %c0_78] : memref<9x1x128xf32, #tpu.memory_space<vmem>>, vector<1x1x128xf32>
    %141 = vector.shape_cast %140 : vector<1x1x128xf32> to vector<1x128xf32>
    %c5_79 = arith.constant 5 : index
    %c0_80 = arith.constant 0 : index
    %c0_81 = arith.constant 0 : index
    %142 = vector.load %arg7[%c5_79, %c0_80, %c0_81] : memref<9x1x128xf32, #tpu.memory_space<vmem>>, vector<1x1x128xf32>
    %143 = vector.shape_cast %142 : vector<1x1x128xf32> to vector<1x128xf32>
    %c6_82 = arith.constant 6 : index
    %c0_83 = arith.constant 0 : index
    %c0_84 = arith.constant 0 : index
    %144 = vector.load %arg7[%c6_82, %c0_83, %c0_84] : memref<9x1x128xf32, #tpu.memory_space<vmem>>, vector<1x1x128xf32>
    %145 = vector.shape_cast %144 : vector<1x1x128xf32> to vector<1x128xf32>
    %c7_85 = arith.constant 7 : index
    %c0_86 = arith.constant 0 : index
    %c0_87 = arith.constant 0 : index
    %146 = vector.load %arg7[%c7_85, %c0_86, %c0_87] : memref<9x1x128xf32, #tpu.memory_space<vmem>>, vector<1x1x128xf32>
    %147 = vector.shape_cast %146 : vector<1x1x128xf32> to vector<1x128xf32>
    %c8_88 = arith.constant 8 : index
    %c0_89 = arith.constant 0 : index
    %c0_90 = arith.constant 0 : index
    %148 = vector.load %arg7[%c8_88, %c0_89, %c0_90] : memref<9x1x128xf32, #tpu.memory_space<vmem>>, vector<1x1x128xf32>
    %149 = vector.shape_cast %148 : vector<1x1x128xf32> to vector<1x128xf32>
    %c9_i32 = arith.constant 9 : i32
    %150 = tpu.dynamic_rotate %131 by %c9_i32 dim 1 : vector<16x128xf32>, i32 -> vector<16x128xf32>
    %151 = vector.broadcast %133 : vector<1x128xf32> to vector<16x128xf32>
    %152 = arith.mulf %150, %151 : vector<16x128xf32>
    %c8_i32 = arith.constant 8 : i32
    %153 = tpu.dynamic_rotate %131 by %c8_i32 dim 1 : vector<16x128xf32>, i32 -> vector<16x128xf32>
    %154 = vector.broadcast %135 : vector<1x128xf32> to vector<16x128xf32>
    %155 = arith.mulf %153, %154 : vector<16x128xf32>
    %c7_i32 = arith.constant 7 : i32
    %156 = tpu.dynamic_rotate %131 by %c7_i32 dim 1 : vector<16x128xf32>, i32 -> vector<16x128xf32>
    %157 = vector.broadcast %137 : vector<1x128xf32> to vector<16x128xf32>
    %158 = arith.mulf %156, %157 : vector<16x128xf32>
    %c1_i32_91 = arith.constant 1 : i32
    %159 = tpu.dynamic_rotate %131 by %c1_i32_91 dim 1 : vector<16x128xf32>, i32 -> vector<16x128xf32>
    %160 = vector.broadcast %139 : vector<1x128xf32> to vector<16x128xf32>
    %161 = arith.mulf %159, %160 : vector<16x128xf32>
    %162 = vector.broadcast %141 : vector<1x128xf32> to vector<16x128xf32>
    %163 = arith.mulf %131, %162 : vector<16x128xf32>
    %c127_i32 = arith.constant 127 : i32
    %164 = tpu.dynamic_rotate %131 by %c127_i32 dim 1 : vector<16x128xf32>, i32 -> vector<16x128xf32>
    %165 = vector.broadcast %143 : vector<1x128xf32> to vector<16x128xf32>
    %166 = arith.mulf %164, %165 : vector<16x128xf32>
    %c121_i32 = arith.constant 121 : i32
    %167 = tpu.dynamic_rotate %131 by %c121_i32 dim 1 : vector<16x128xf32>, i32 -> vector<16x128xf32>
    %168 = vector.broadcast %145 : vector<1x128xf32> to vector<16x128xf32>
    %169 = arith.mulf %167, %168 : vector<16x128xf32>
    %c120_i32 = arith.constant 120 : i32
    %170 = tpu.dynamic_rotate %131 by %c120_i32 dim 1 : vector<16x128xf32>, i32 -> vector<16x128xf32>
    %171 = vector.broadcast %147 : vector<1x128xf32> to vector<16x128xf32>
    %172 = arith.mulf %170, %171 : vector<16x128xf32>
    %c119_i32 = arith.constant 119 : i32
    %173 = tpu.dynamic_rotate %131 by %c119_i32 dim 1 : vector<16x128xf32>, i32 -> vector<16x128xf32>
    %174 = vector.broadcast %149 : vector<1x128xf32> to vector<16x128xf32>
    %175 = arith.mulf %173, %174 : vector<16x128xf32>
    %176 = tpu.concatenate %152, %155, %158, %161, %163, %166, %169, %172, %175 in 0 : vector<16x128xf32>, vector<16x128xf32>, vector<16x128xf32>, vector<16x128xf32>, vector<16x128xf32>, vector<16x128xf32>, vector<16x128xf32>, vector<16x128xf32>, vector<16x128xf32> -> vector<144x128xf32>
    %c0_92 = arith.constant 0 : index
    %c0_93 = arith.constant 0 : index
    %c0_94 = arith.constant 0 : index
    %177 = vector.load %arg5[%c0_92, %c0_93, %c0_94] : memref<3x16x144xf32, #tpu.memory_space<vmem>>, vector<1x16x144xf32>
    %178 = vector.shape_cast %177 : vector<1x16x144xf32> to vector<16x144xf32>
    %cst_95 = arith.constant dense<0.000000e+00> : vector<16x128xf32>
    %179 = tpu.matmul %178, %176, %cst_95 {dimension_numbers = #tpu.dot_dimension_numbers<[1], [0], [0], [1], [0, 0, 1, 1], [], []>} : vector<16x144xf32>, vector<144x128xf32>, vector<16x128xf32> -> vector<16x128xf32>
    %c0_96 = arith.constant 0 : index
    %c0_97 = arith.constant 0 : index
    %c0_98 = arith.constant 0 : index
    %180 = vector.load %arg6[%c0_96, %c0_97, %c0_98] : memref<3x16x1xf32, #tpu.memory_space<vmem>>, vector<1x16x1xf32>
    %181 = vector.shape_cast %180 : vector<1x16x1xf32> to vector<16x1xf32>
    %182 = vector.broadcast %181 : vector<16x1xf32> to vector<16x128xf32>
    %183 = arith.addf %179, %182 : vector<16x128xf32>
    %cst_99 = arith.constant 0.000000e+00 : f32
    %184 = vector.broadcast %cst_99 : f32 to vector<16x128xf32>
    %185 = arith.maximumf %183, %184 : vector<16x128xf32>
    %c9_i32_100 = arith.constant 9 : i32
    %186 = tpu.dynamic_rotate %185 by %c9_i32_100 dim 1 : vector<16x128xf32>, i32 -> vector<16x128xf32>
    %187 = vector.broadcast %133 : vector<1x128xf32> to vector<16x128xf32>
    %188 = arith.mulf %186, %187 : vector<16x128xf32>
    %c8_i32_101 = arith.constant 8 : i32
    %189 = tpu.dynamic_rotate %185 by %c8_i32_101 dim 1 : vector<16x128xf32>, i32 -> vector<16x128xf32>
    %190 = vector.broadcast %135 : vector<1x128xf32> to vector<16x128xf32>
    %191 = arith.mulf %189, %190 : vector<16x128xf32>
    %c7_i32_102 = arith.constant 7 : i32
    %192 = tpu.dynamic_rotate %185 by %c7_i32_102 dim 1 : vector<16x128xf32>, i32 -> vector<16x128xf32>
    %193 = vector.broadcast %137 : vector<1x128xf32> to vector<16x128xf32>
    %194 = arith.mulf %192, %193 : vector<16x128xf32>
    %c1_i32_103 = arith.constant 1 : i32
    %195 = tpu.dynamic_rotate %185 by %c1_i32_103 dim 1 : vector<16x128xf32>, i32 -> vector<16x128xf32>
    %196 = vector.broadcast %139 : vector<1x128xf32> to vector<16x128xf32>
    %197 = arith.mulf %195, %196 : vector<16x128xf32>
    %198 = vector.broadcast %141 : vector<1x128xf32> to vector<16x128xf32>
    %199 = arith.mulf %185, %198 : vector<16x128xf32>
    %c127_i32_104 = arith.constant 127 : i32
    %200 = tpu.dynamic_rotate %185 by %c127_i32_104 dim 1 : vector<16x128xf32>, i32 -> vector<16x128xf32>
    %201 = vector.broadcast %143 : vector<1x128xf32> to vector<16x128xf32>
    %202 = arith.mulf %200, %201 : vector<16x128xf32>
    %c121_i32_105 = arith.constant 121 : i32
    %203 = tpu.dynamic_rotate %185 by %c121_i32_105 dim 1 : vector<16x128xf32>, i32 -> vector<16x128xf32>
    %204 = vector.broadcast %145 : vector<1x128xf32> to vector<16x128xf32>
    %205 = arith.mulf %203, %204 : vector<16x128xf32>
    %c120_i32_106 = arith.constant 120 : i32
    %206 = tpu.dynamic_rotate %185 by %c120_i32_106 dim 1 : vector<16x128xf32>, i32 -> vector<16x128xf32>
    %207 = vector.broadcast %147 : vector<1x128xf32> to vector<16x128xf32>
    %208 = arith.mulf %206, %207 : vector<16x128xf32>
    %c119_i32_107 = arith.constant 119 : i32
    %209 = tpu.dynamic_rotate %185 by %c119_i32_107 dim 1 : vector<16x128xf32>, i32 -> vector<16x128xf32>
    %210 = vector.broadcast %149 : vector<1x128xf32> to vector<16x128xf32>
    %211 = arith.mulf %209, %210 : vector<16x128xf32>
    %212 = tpu.concatenate %188, %191, %194, %197, %199, %202, %205, %208, %211 in 0 : vector<16x128xf32>, vector<16x128xf32>, vector<16x128xf32>, vector<16x128xf32>, vector<16x128xf32>, vector<16x128xf32>, vector<16x128xf32>, vector<16x128xf32>, vector<16x128xf32> -> vector<144x128xf32>
    %c1_108 = arith.constant 1 : index
    %c0_109 = arith.constant 0 : index
    %c0_110 = arith.constant 0 : index
    %213 = vector.load %arg5[%c1_108, %c0_109, %c0_110] : memref<3x16x144xf32, #tpu.memory_space<vmem>>, vector<1x16x144xf32>
    %214 = vector.shape_cast %213 : vector<1x16x144xf32> to vector<16x144xf32>
    %cst_111 = arith.constant dense<0.000000e+00> : vector<16x128xf32>
    %215 = tpu.matmul %214, %212, %cst_111 {dimension_numbers = #tpu.dot_dimension_numbers<[1], [0], [0], [1], [0, 0, 1, 1], [], []>} : vector<16x144xf32>, vector<144x128xf32>, vector<16x128xf32> -> vector<16x128xf32>
    %c1_112 = arith.constant 1 : index
    %c0_113 = arith.constant 0 : index
    %c0_114 = arith.constant 0 : index
    %216 = vector.load %arg6[%c1_112, %c0_113, %c0_114] : memref<3x16x1xf32, #tpu.memory_space<vmem>>, vector<1x16x1xf32>
    %217 = vector.shape_cast %216 : vector<1x16x1xf32> to vector<16x1xf32>
    %218 = vector.broadcast %217 : vector<16x1xf32> to vector<16x128xf32>
    %219 = arith.addf %215, %218 : vector<16x128xf32>
    %cst_115 = arith.constant 0.000000e+00 : f32
    %220 = vector.broadcast %cst_115 : f32 to vector<16x128xf32>
    %221 = arith.maximumf %219, %220 : vector<16x128xf32>
    %c9_i32_116 = arith.constant 9 : i32
    %222 = tpu.dynamic_rotate %221 by %c9_i32_116 dim 1 : vector<16x128xf32>, i32 -> vector<16x128xf32>
    %223 = vector.broadcast %133 : vector<1x128xf32> to vector<16x128xf32>
    %224 = arith.mulf %222, %223 : vector<16x128xf32>
    %c8_i32_117 = arith.constant 8 : i32
    %225 = tpu.dynamic_rotate %221 by %c8_i32_117 dim 1 : vector<16x128xf32>, i32 -> vector<16x128xf32>
    %226 = vector.broadcast %135 : vector<1x128xf32> to vector<16x128xf32>
    %227 = arith.mulf %225, %226 : vector<16x128xf32>
    %c7_i32_118 = arith.constant 7 : i32
    %228 = tpu.dynamic_rotate %221 by %c7_i32_118 dim 1 : vector<16x128xf32>, i32 -> vector<16x128xf32>
    %229 = vector.broadcast %137 : vector<1x128xf32> to vector<16x128xf32>
    %230 = arith.mulf %228, %229 : vector<16x128xf32>
    %c1_i32_119 = arith.constant 1 : i32
    %231 = tpu.dynamic_rotate %221 by %c1_i32_119 dim 1 : vector<16x128xf32>, i32 -> vector<16x128xf32>
    %232 = vector.broadcast %139 : vector<1x128xf32> to vector<16x128xf32>
    %233 = arith.mulf %231, %232 : vector<16x128xf32>
    %234 = vector.broadcast %141 : vector<1x128xf32> to vector<16x128xf32>
    %235 = arith.mulf %221, %234 : vector<16x128xf32>
    %c127_i32_120 = arith.constant 127 : i32
    %236 = tpu.dynamic_rotate %221 by %c127_i32_120 dim 1 : vector<16x128xf32>, i32 -> vector<16x128xf32>
    %237 = vector.broadcast %143 : vector<1x128xf32> to vector<16x128xf32>
    %238 = arith.mulf %236, %237 : vector<16x128xf32>
    %c121_i32_121 = arith.constant 121 : i32
    %239 = tpu.dynamic_rotate %221 by %c121_i32_121 dim 1 : vector<16x128xf32>, i32 -> vector<16x128xf32>
    %240 = vector.broadcast %145 : vector<1x128xf32> to vector<16x128xf32>
    %241 = arith.mulf %239, %240 : vector<16x128xf32>
    %c120_i32_122 = arith.constant 120 : i32
    %242 = tpu.dynamic_rotate %221 by %c120_i32_122 dim 1 : vector<16x128xf32>, i32 -> vector<16x128xf32>
    %243 = vector.broadcast %147 : vector<1x128xf32> to vector<16x128xf32>
    %244 = arith.mulf %242, %243 : vector<16x128xf32>
    %c119_i32_123 = arith.constant 119 : i32
    %245 = tpu.dynamic_rotate %221 by %c119_i32_123 dim 1 : vector<16x128xf32>, i32 -> vector<16x128xf32>
    %246 = vector.broadcast %149 : vector<1x128xf32> to vector<16x128xf32>
    %247 = arith.mulf %245, %246 : vector<16x128xf32>
    %248 = tpu.concatenate %224, %227, %230, %233, %235, %238, %241, %244, %247 in 0 : vector<16x128xf32>, vector<16x128xf32>, vector<16x128xf32>, vector<16x128xf32>, vector<16x128xf32>, vector<16x128xf32>, vector<16x128xf32>, vector<16x128xf32>, vector<16x128xf32> -> vector<144x128xf32>
    %c2_124 = arith.constant 2 : index
    %c0_125 = arith.constant 0 : index
    %c0_126 = arith.constant 0 : index
    %249 = vector.load %arg5[%c2_124, %c0_125, %c0_126] : memref<3x16x144xf32, #tpu.memory_space<vmem>>, vector<1x16x144xf32>
    %250 = vector.shape_cast %249 : vector<1x16x144xf32> to vector<16x144xf32>
    %cst_127 = arith.constant dense<0.000000e+00> : vector<16x128xf32>
    %251 = tpu.matmul %250, %248, %cst_127 {dimension_numbers = #tpu.dot_dimension_numbers<[1], [0], [0], [1], [0, 0, 1, 1], [], []>} : vector<16x144xf32>, vector<144x128xf32>, vector<16x128xf32> -> vector<16x128xf32>
    %c2_128 = arith.constant 2 : index
    %c0_129 = arith.constant 0 : index
    %c0_130 = arith.constant 0 : index
    %252 = vector.load %arg6[%c2_128, %c0_129, %c0_130] : memref<3x16x1xf32, #tpu.memory_space<vmem>>, vector<1x16x1xf32>
    %253 = vector.shape_cast %252 : vector<1x16x1xf32> to vector<16x1xf32>
    %254 = vector.broadcast %253 : vector<16x1xf32> to vector<16x128xf32>
    %255 = arith.addf %251, %254 : vector<16x128xf32>
    %cst_131 = arith.constant 0.000000e+00 : f32
    %256 = vector.broadcast %cst_131 : f32 to vector<16x128xf32>
    %257 = arith.maximumf %255, %256 : vector<16x128xf32>
    %258 = vector.extract_strided_slice %257 {offsets = [0, 0], sizes = [16, 64], strides = [1, 1]} : vector<16x128xf32> to vector<16x64xf32>
    %cst_132 = arith.constant dense<0.000000e+00> : vector<16xf32>
    %259 = vector.multi_reduction <add>, %258, %cst_132 [1] : vector<16x64xf32> to vector<16xf32>
    %260 = vector.shape_cast %259 : vector<16xf32> to vector<16x1xf32>
    %cst_133 = arith.constant 6.400000e+01 : f32
    %261 = vector.broadcast %cst_133 : f32 to vector<16x1xf32>
    %262 = arith.divf %260, %261 : vector<16x1xf32>
    %c0_134 = arith.constant 0 : index
    %c0_135 = arith.constant 0 : index
    %c0_136 = arith.constant 0 : index
    %263 = vector.load %arg9[%c0_134, %c0_135, %c0_136] : memref<1x16x1xf32, #tpu.memory_space<vmem>>, vector<1x16x1xf32>
    %264 = vector.shape_cast %263 : vector<1x16x1xf32> to vector<16x1xf32>
    %265 = vector.shape_cast %262 : vector<16x1xf32> to vector<1x16x1xf32>
    tpu.vector_store %arg9[%c0_134, %c0_135, %c0_136], %265 {strides = array<i32>} : memref<1x16x1xf32, #tpu.memory_space<vmem>>, vector<1x16x1xf32>,
    return
  }
  func.func @transform_0(%arg0: i32) -> (i32, i32, i32) {
    %c0_i32 = arith.constant 0 : i32
    %c0_i32_0 = arith.constant 0 : i32
    %c0_i32_1 = arith.constant 0 : i32
    return %arg0, %c0_i32, %c0_i32_0 : i32, i32, i32
  }
  func.func @transform_1(%arg0: i32) -> (i32, i32, i32) {
    %c0_i32 = arith.constant 0 : i32
    %c0_i32_0 = arith.constant 0 : i32
    %c0_i32_1 = arith.constant 0 : i32
    %c0_i32_2 = arith.constant 0 : i32
    return %c0_i32, %c0_i32_0, %c0_i32_1 : i32, i32, i32
  }
  func.func @transform_2(%arg0: i32) -> (i32, i32, i32) {
    %c0_i32 = arith.constant 0 : i32
    %c0_i32_0 = arith.constant 0 : i32
    %c0_i32_1 = arith.constant 0 : i32
    %c0_i32_2 = arith.constant 0 : i32
    return %c0_i32, %c0_i32_0, %c0_i32_1 : i32, i32, i32
  }
  func.func @transform_3(%arg0: i32) -> (i32, i32, i32) {
    %c0_i32 = arith.constant 0 : i32
    %c0_i32_0 = arith.constant 0 : i32
    %c0_i32_1 = arith.constant 0 : i32
    %c0_i32_2 = arith.constant 0 : i32
    return %c0_i32, %c0_i32_0, %c0_i32_1 : i32, i32, i32
  }
  func.func @transform_4(%arg0: i32) -> (i32, i32, i32) {
    %c0_i32 = arith.constant 0 : i32
    %c0_i32_0 = arith.constant 0 : i32
    %c0_i32_1 = arith.constant 0 : i32
    %c0_i32_2 = arith.constant 0 : i32
    return %c0_i32, %c0_i32_0, %c0_i32_1 : i32, i32, i32
  }
  func.func @transform_5(%arg0: i32) -> (i32, i32, i32) {
    %c0_i32 = arith.constant 0 : i32
    %c0_i32_0 = arith.constant 0 : i32
    %c0_i32_1 = arith.constant 0 : i32
    %c0_i32_2 = arith.constant 0 : i32
    return %c0_i32, %c0_i32_0, %c0_i32_1 : i32, i32, i32
  }
  func.func @transform_6(%arg0: i32) -> (i32, i32, i32) {
    %c0_i32 = arith.constant 0 : i32
    %c0_i32_0 = arith.constant 0 : i32
    %c0_i32_1 = arith.constant 0 : i32
    %c0_i32_2 = arith.constant 0 : i32
    return %c0_i32, %c0_i32_0, %c0_i32_1 : i32, i32, i32
  }
  func.func @transform_7(%arg0: i32) -> (i32, i32) {
    %c0_i32 = arith.constant 0 : i32
    %c0_i32_0 = arith.constant 0 : i32
    %c0_i32_1 = arith.constant 0 : i32
    return %c0_i32, %c0_i32_0 : i32, i32
  }
  func.func @transform_8(%arg0: i32) -> (i32, i32, i32) {
    %c0_i32 = arith.constant 0 : i32
    %c0_i32_0 = arith.constant 0 : i32
    %c0_i32_1 = arith.constant 0 : i32
    return %arg0, %c0_i32, %c0_i32_0 : i32, i32, i32
  }
}

</mosaic_0001>

<llo_original>
// kernel: custom-call.8
$region0: #{custom-call.8}
  %s0 = inlined_call_operand.vmem [shape: f32[2,6,6], index: 0, kind: input, shape index: {}]
  %s1 = inlined_call_operand.vmem [shape: f32[2,6,6], index: 1, kind: output, shape index: {0}]
  %s2 = inlined_call_operand.hbm [shape: s32[2,6], index: 2, kind: output, shape index: {1}]
  %s3 = inlined_call_operand.hbm [shape: s32[2,6], index: 3, kind: output, shape index: {2}]
  %4 = xla_tuple %s1, %s2, %s3
  $region1: #{custom-call.8} parent=0
    #allocation0 [shape = 'u8[8192]{0}', space=vmem, size = 0x2000, scoped, tag = 'operand span for operand 0']
    #allocation1 [shape = 'u8[8192]{0}', space=vmem, size = 0x2000, scoped, tag = 'operand span for operand 1']
    #allocation2 [shape = 'u8[4096]{0}', space=vmem, size = 0x1000, scoped, tag = 'operand span for operand 2']
    #allocation3 [shape = 'u8[2048]{0}', space=vmem, size = 0x800, scoped, tag = 'packed  for operand 2']
    #allocation4 [shape = 's32[2]{0}', space=sflag, size = 0x8, scoped, tag = 'scoped memory for custom-call.8']
    #allocation5 [shape = 'u8[4096]{0}', space=vmem, size = 0x1000, scoped, tag = 'operand span for operand 3']
    #allocation6 [shape = 'u8[2048]{0}', space=vmem, size = 0x800, scoped, tag = 'packed  for operand 3']
    #allocation7 [shape = 's32[2]{0}', space=sflag, size = 0x8, scoped, tag = 'scoped memory for custom-call.8']
    %5 = vsyncpa [#allocation4], 0
    %s6 = scalar_lea.sflag [#allocation4], 1
    %7 = vsyncpa %s6, 0
    %8 = vsyncpa [#allocation7], 0
    %s9 = scalar_lea.sflag [#allocation7], 1
    %10 = vsyncpa %s9, 0
    loop: start=0, step=1, limit=4
    $region2: #{custom-call.8} parent=1 // loop_pre_header
      _
    $region3: #{custom-call.8} parent=1 // loop_header
      %s12 = sphi 0, %s16
      %p13 = scmp.ge.s32.totalorder %s12, 4
      %s24 = sphi 0, %s26
      %s27 = sphi 0, %s24
      %s28 = sphi 0, %s27
      %s44 = sphi 0, %s28
      %s52 = sphi 0, %s54
      %s55 = sphi 0, %s52
      %s56 = sphi 0, %s55
      %s72 = sphi 0, %s56
    $region4: #{custom-call.8} parent=1 // loop_header_branch
      %15 = sbr.rel (%p13) target = $region8
    $region5: #{custom-call.8} parent=1 // loop_body
      %s17 = ssub.s32 %s12, 1
      %s18 = ssub.s32 %s12, 2
      %s19 = sadd.s32 %s12, 1
      %s20 = sshrl.u32 %s12, 3
      %s21 = sshrl.u32 %s19, 3
      %s22 = ssub.s32 %s20, %s21
      %p23 = scmp.eq.s32.totalorder %s22, 0
      %s25 = sadd.s32 %s24, 1
      %s26 = scalar_select %p23, %s24, %s25
      %p29 = pneg %p23
      %p30 = scmp.eq.s32.totalorder %s12, 1
      %p31 = por %p29, %p30
      %p32 = scmp.ne.s32.totalorder %s24, %s27
      %p33 = scmp.eq.s32.totalorder %s12, 0
      %p34 = por %p32, %p33
      %p35 = scmp.ne.s32.totalorder %s24, %s27
      %p36 = scmp.eq.s32.totalorder %s17, 1
      %p37 = por %p35, %p36
      %p38 = scmp.ne.s32.totalorder %s27, %s28
      %p39 = scmp.eq.s32.totalorder %s17, 0
      %p40 = por %p38, %p39
      %p41 = scmp.ne.s32.totalorder %s27, %s28
      %p42 = scmp.eq.s32.totalorder %s18, 1
      %p43 = por %p41, %p42
      %p45 = scmp.ne.s32.totalorder %s28, %s44
      %p46 = scmp.eq.s32.totalorder %s18, 0
      %p47 = por %p45, %p46
      %s48 = sshrl.u32 %s12, 3
      %s49 = sshrl.u32 %s19, 3
      %s50 = ssub.s32 %s48, %s49
      %p51 = scmp.eq.s32.totalorder %s50, 0
      %s53 = sadd.s32 %s52, 1
      %s54 = scalar_select %p51, %s52, %s53
      %p57 = pneg %p51
      %p58 = scmp.eq.s32.totalorder %s12, 1
      %p59 = por %p57, %p58
      %p60 = scmp.ne.s32.totalorder %s52, %s55
      %p61 = scmp.eq.s32.totalorder %s12, 0
      %p62 = por %p60, %p61
      %p63 = scmp.ne.s32.totalorder %s52, %s55
      %p64 = scmp.eq.s32.totalorder %s17, 1
      %p65 = por %p63, %p64
      %p66 = scmp.ne.s32.totalorder %s55, %s56
      %p67 = scmp.eq.s32.totalorder %s17, 0
      %p68 = por %p66, %p67
      %p69 = scmp.ne.s32.totalorder %s55, %s56
      %p70 = scmp.eq.s32.totalorder %s18, 1
      %p71 = por %p69, %p70
      %p73 = scmp.ne.s32.totalorder %s56, %s72
      %p74 = scmp.eq.s32.totalorder %s18, 0
      %p75 = por %p73, %p74
      %p76 = scmp.le.s32.totalorder 1, %s12
      %p77 = scmp.lt.s32.totalorder %s12, 3
      %p78 = pnand %p76, %p77
      %p79 = pneg %p78
      // Predicated region
      $region9: #{custom-call.8} parent=5 // pred_check
        _
      $region10: #{custom-call.8} parent=5 // pred_check_branch
        %81 = sbr.rel (%p78) target = $region12
      $region11: #{custom-call.8} parent=5 // pred_region
        %s82 = ssub.s32 %s12, 1
      $region12: #{custom-call.8} parent=5 // pred_fallthru
        _
      %p83 = scmp.lt.s32.totalorder %s12, 2
      // Predicated region
      $region13: #{custom-call.8} parent=5 // pred_check
        %p84 = pneg %p83
      $region14: #{custom-call.8} parent=5 // pred_check_branch
        %86 = sbr.rel (%p84) target = $region16
      $region15: #{custom-call.8} parent=5 // pred_region
        %s87 = sand.u32 %s12, 1
        %s88 = sand.u32 %s12, 1
        %s89 = smul.addr %s88, 8
        %s90 = scalar_lea.vmem [#allocation0], %s89
        %s91 = smul.addr %s12, 8
        %s92 = scalar_lea.vmem %s0, %s91
        // Predicated region
        $region17: #{custom-call.8} parent=15 // pred_check
          _
        $region18: #{custom-call.8} parent=15 // pred_check_branch
          %94 = sbr.rel (0) target = $region20
        $region19: #{custom-call.8} parent=15 // pred_region
          // Predicated region
          $region21: #{custom-call.8} parent=19 // pred_check
            _
          $region22: #{custom-call.8} parent=19 // pred_check_branch
            %96 = sbr.rel (0) target = $region24
          $region23: #{custom-call.8} parent=19 // pred_region
            // Predicated region
            $region36: #{custom-call.8} parent=23 // pred_check
              _
            $region37: #{custom-call.8} parent=23 // pred_check_branch
              %111 = sbr.rel (0) target = $region39
            $region38: #{custom-call.8} parent=23 // pred_region
              loop: start=0, step=1, limit=1
              $region40: #{custom-call.8} parent=38 // loop_pre_header
                _
              $region41: #{custom-call.8} parent=38 // loop_header
                %s113 = sphi 0, %s117
                %p114 = scmp.ge.s32.totalorder %s113, 1
                %s118 = sphi %s92, %s92
                %s119 = sphi %s90, %s90
              $region42: #{custom-call.8} parent=38 // loop_header_branch
                %116 = sbr.rel (%p114) target = $region46
              $region43: #{custom-call.8} parent=38 // loop_body
                %v120 = vld [vmem:[%s118] sm:$0xff]
                %121 = vst [vmem:[%s119] sm:$0xff] %v120
              $region44: #{custom-call.8} parent=38 // loop_footer
                %s117 = sadd.s32 1, %s113
              $region45: #{custom-call.8} parent=38 // loop_footer_branch
                %112 = sbr.rel target = $region41
              $region46: #{custom-call.8} parent=38 // loop_exit
                _
            $region39: #{custom-call.8} parent=23 // pred_fallthru
              _
            // Predicated region
            $region47: #{custom-call.8} parent=23 // pred_check
              _
            $region48: #{custom-call.8} parent=23 // pred_check_branch
              %123 = sbr.rel target = $region50
            $region49: #{custom-call.8} parent=23 // pred_region
              _
            $region50: #{custom-call.8} parent=23 // pred_fallthru
              _
          $region24: #{custom-call.8} parent=19 // pred_fallthru
            _
          // Predicated region
          $region25: #{custom-call.8} parent=19 // pred_check
            _
          $region26: #{custom-call.8} parent=19 // pred_check_branch
            %98 = sbr.rel target = $region28
          $region27: #{custom-call.8} parent=19 // pred_region
            loop: start=0, step=1, limit=1
            $region29: #{custom-call.8} parent=27 // loop_pre_header
              _
            $region30: #{custom-call.8} parent=27 // loop_header
              %s101 = sphi 0, %s105
              %p102 = scmp.ge.s32.totalorder %s101, 1
              %s106 = sphi %s92, %s92
              %s107 = sphi %s90, %s90
            $region31: #{custom-call.8} parent=27 // loop_header_branch
              %104 = sbr.rel (%p102) target = $region35
            $region32: #{custom-call.8} parent=27 // loop_body
              %v108 = vld [vmem:[%s106] sm:$0xff]
              %109 = vst [vmem:[%s107] sm:$0xff] %v108
            $region33: #{custom-call.8} parent=27 // loop_footer
              %s105 = sadd.s32 1, %s101
            $region34: #{custom-call.8} parent=27 // loop_footer_branch
              %100 = sbr.rel target = $region30
            $region35: #{custom-call.8} parent=27 // loop_exit
              _
          $region28: #{custom-call.8} parent=19 // pred_fallthru
            _
        $region20: #{custom-call.8} parent=15 // pred_fallthru
          _
        %124 = vnop
      $region16: #{custom-call.8} parent=5 // pred_fallthru
        _
      %p125 = scmp.le.s32.totalorder 1, %s12
      %p126 = scmp.lt.s32.totalorder %s12, 3
      %p127 = pnand %p125, %p126
      %p128 = pneg %p127
      // Predicated region
      $region51: #{custom-call.8} parent=5 // pred_check
        _
      $region52: #{custom-call.8} parent=5 // pred_check_branch
        %130 = sbr.rel (%p127) target = $region54
      $region53: #{custom-call.8} parent=5 // pred_region
        #allocation8 [shape = 's32[6,128]{1,0}', space=vmem, size = 0x1000, scoped, tag = 'scratch for permutations']
        %s131 = ssub.s32 %s12, 1
        %s132 = sand.u32 %s17, 1
        %s133 = sand.u32 %s17, 1
        %s134 = smul.addr %s133, 8
        %s135 = scalar_lea.vmem [#allocation0], %s134
        %s136 = sand.u32 %s17, 1
        %s137 = sand.u32 %s17, 1
        %s138 = smul.addr %s137, 8
        %s139 = scalar_lea.vmem [#allocation0], %s138
        %s140 = sand.u32 %s17, 1
        %s141 = sand.u32 %s17, 1
        %s142 = smul.addr %s141, 8
        %s143 = scalar_lea.vmem [#allocation1], %s142
        %p144 = pneg %p40
        %p145 = pneg %p37
        %s146 = sand.u32 %s27, 1
        %s147 = scalar_lea.sflag [#allocation4], %s146
        %s148 = sand.u32 %s27, 1
        %s149 = smul.addr %s148, 2
        %s150 = scalar_lea.vmem [#allocation3], %s149
        %p151 = pneg %p68
        %p152 = pneg %p65
        %s153 = sand.u32 %s55, 1
        %s154 = scalar_lea.sflag [#allocation7], %s153
        %s155 = sand.u32 %s55, 1
        %s156 = smul.addr %s155, 2
        %s157 = scalar_lea.vmem [#allocation6], %s156
        %s158 = sshrl.u32 %s17, 3
        %s159 = sshrl.u32 %s17, 3
        %v160 = vld [vmem:[%s135] sm:$0xff]
        %161 = vst [vmem:[%s143] sm:$0xff] %v160
        %s162 = sand.u32 %s17, 7
        %s163 = scalar_lea.vmem [#allocation2], %s162
        %s164 = sand.u32 %s17, 7
        %s165 = scalar_lea.vmem [#allocation5], %s164
        %166 = vst [vmem:[%s163] sm:$0x1] 0
        %v167 = vlaneseq
        %v168 = vshrl.u32 %v167, 7
        %v169 = vmov %v168
        %171 = vst [vmem:[#allocation8] sm:$0xff] %v169
        loop: start=0, step=1, limit=6
        $region56: #{custom-call.8} parent=53 // loop_pre_header
          _
        $region57: #{custom-call.8} parent=53 // loop_header
          %s173 = sphi 0, %s177
          %p174 = scmp.ge.s32.totalorder %s173, 6
        $region58: #{custom-call.8} parent=53 // loop_header_branch
          %176 = sbr.rel (%p174) target = $region62
        $region59: #{custom-call.8} parent=53 // loop_body
          %v178 = vstv %s173
          %v179 = vlaneseq
          %v180 = vshrl.u32 %v179, 7
          %v181 = vmov %v180
          %v182 = vld [vmem:[%s143] sm:$0xff]
          %v183 = vand.u32 2147483647, %v182
          %v185 = vstv %s173
          %vm186 = vcmp.ge.s32.totalorder %v181, %v185
          %vm187 = vcmp.lt.s32.totalorder %v181, 6
          %vm188 = vmand %vm186, %vm187
          %vm189 = vcmp.lt.f32.partialorder -inf, %v183
          %vm190 = vmand %vm188, %vm189
          %v191 = vsel %vm190, %v181, %v178
          %v192 = vsel %vm190, %v183, -inf
          %v193 = vrot.slane %v192, 1
          %v194 = vrot.slane %v191, 1
          %vm195 = vcmp.ge.f32.partialorder %v193, %v192
          %v196 = vsel %vm195, %v193, %v192
          %v197 = vsel %vm195, %v194, %v191
          %v198 = vrot.slane %v193, 1
          %v199 = vrot.slane %v194, 1
          %vm200 = vcmp.ge.f32.partialorder %v198, %v196
          %v201 = vsel %vm200, %v198, %v196
          %v202 = vsel %vm200, %v199, %v197
          %v203 = vrot.slane %v198, 1
          %v204 = vrot.slane %v199, 1
          %vm205 = vcmp.ge.f32.partialorder %v203, %v201
          %v206 = vsel %vm205, %v203, %v201
          %v207 = vsel %vm205, %v204, %v202
          %v208 = vrot.slane %v203, 1
          %v209 = vrot.slane %v204, 1
          %vm210 = vcmp.ge.f32.partialorder %v208, %v206
          %v211 = vsel %vm210, %v208, %v206
          %v212 = vsel %vm210, %v209, %v207
          %v213 = vrot.slane %v208, 1
          %v214 = vrot.slane %v209, 1
          %vm215 = vcmp.ge.f32.partialorder %v213, %v211
          %v216 = vsel %vm215, %v213, %v211
          %v217 = vsel %vm215, %v214, %v212
          %v218 = vrot.slane %v213, 1
          %v219 = vrot.slane %v214, 1
          %vm220 = vcmp.ge.f32.partialorder %v218, %v216
          %v221 = vsel %vm220, %v218, %v216
          %v222 = vsel %vm220, %v219, %v217
          %v223 = vrot.slane %v218, 1
          %v224 = vrot.slane %v219, 1
          %vm225 = vcmp.ge.f32.partialorder %v223, %v221
          %v226 = vsel %vm225, %v223, %v221
          %v227 = vsel %vm225, %v224, %v222
          %s228 = ssub.s32 128, %s173
          %229 = vrot.lane.b32.xlu0 %v227, %s228
          %v230 = vpop.permute.xlu0 %229
          %s231 = vtos %v230
          %v232 = vstv %s173
          %v233 = vlaneseq
          %v234 = vand.u32 %v233, 127
          %vm235 = vcmp.eq.s32.totalorder %v234, %v232
          %v236 = vstv %s231
          %v237 = vld [vmem:[%s163] ss:$0 sm:$0xff]
          %v238 = vsel %vm235, %v236, %v237
          %239 = vst [vmem:[%s163] sm:$0x1] %v238
          %s240 = scalar_lea.vmem %s143, %s173 [#allocation1]
          %s241 = scalar_lea.vmem %s143, %s231 [#allocation1]
          %v242 = vld [vmem:[%s240] ss:$0 sm:$0xff]
          %v243 = vld [vmem:[%s241] ss:$0 sm:$0xff]
          %244 = vst [vmem:[%s241] sm:$0x1] %v242
          %245 = vst [vmem:[%s240] sm:$0x1] %v243
          %s246 = scalar_lea.vmem [#allocation8], %s173
          %s247 = scalar_lea.vmem [#allocation8], %s231
          %v248 = vld [vmem:[%s246] ss:$0 sm:$0xff]
          %v249 = vld [vmem:[%s247] ss:$0 sm:$0xff]
          %250 = vst [vmem:[%s247] sm:$0x1] %v248
          %251 = vst [vmem:[%s246] sm:$0x1] %v249
          %vm252 = vcmp.ne.f32.partialorder %v243, 0.0
          %vm253 = vmand %vm235, %vm252
          %v254 = vsel %vm253, %v243, 1.0
          %v255 = vlaneseq
          %v256 = vand.u32 %v255, 127
          %v257 = vstv %s173
          %vm258 = vcmp.gt.s32.totalorder %v256, %v257
          %v259 = vsel %vm258, %v243, 0.0
          %v260 = vlaneseq
          %v261 = vshrl.u32 %v260, 7
          %v262 = vmov %v261
          %v263 = vld [vmem:[%s143] sm:$0xff]
          %v265 = vstv %s173
          %vm266 = vcmp.gt.s32.totalorder %v262, %v265
          %v267 = vsel %vm266, %v254, 1.0
          %v268 = vrcp.pop %v267
          %v269 = vmul.f32 %v263, %v268
          %vm270 = vmand %vm266, %vm235
          %v271 = vsel %vm270, %v269, 0.0
          %272 = vadd.xlane.f32.xlu0 %v271
          %v273 = vpop.xlane.xlu0 %272
          %v274 = vmul.f32 %v273, %v259
          %v275 = vsub.f32 %v269, %v274
          %276 = vst [vmem:[%s143] sm:$0xff] %v275
        $region60: #{custom-call.8} parent=53 // loop_footer
          %s177 = sadd.s32 1, %s173
        $region61: #{custom-call.8} parent=53 // loop_footer_branch
          %172 = sbr.rel target = $region57
        $region62: #{custom-call.8} parent=53 // loop_exit
          _
        %v277 = vld [vmem:[#allocation8] sm:$0xff]
        %s278 = scalar_lea.vmem [#allocation8], 8
        %s279 = scalar_lea.vmem [#allocation8], 16
        %s280 = scalar_lea.vmem [#allocation8], 24
        %s281 = scalar_lea.vmem [#allocation8], 32
        %s282 = scalar_lea.vmem [#allocation8], 40
        %s283 = scalar_lea.vmem [#allocation8], 48
        %s284 = scalar_lea.vmem [#allocation8], 56
        %s285 = scalar_lea.vmem [#allocation8], 64
        %s286 = scalar_lea.vmem [#allocation8], 72
        %s287 = scalar_lea.vmem [#allocation8], 80
        %s288 = scalar_lea.vmem [#allocation8], 88
        %s289 = scalar_lea.vmem [#allocation8], 96
        %s290 = scalar_lea.vmem [#allocation8], 104
        %s291 = scalar_lea.vmem [#allocation8], 112
        %s292 = scalar_lea.vmem [#allocation8], 120
        %293 = vxpose.xlu0.b32.start [1/16] %v277, 128
        %294 = vxpose.xlu0.b32.cont [2/16] 0, 128
        %295 = vxpose.xlu0.b32.cont [3/16] 0, 128
        %296 = vxpose.xlu0.b32.cont [4/16] 0, 128
        %297 = vxpose.xlu0.b32.cont [5/16] 0, 128
        %298 = vxpose.xlu0.b32.cont [6/16] 0, 128
        %299 = vxpose.xlu0.b32.cont [7/16] 0, 128
        %300 = vxpose.xlu0.b32.cont [8/16] 0, 128
        %301 = vxpose.xlu0.b32.cont [9/16] 0, 128
        %302 = vxpose.xlu0.b32.cont [10/16] 0, 128
        %303 = vxpose.xlu0.b32.cont [11/16] 0, 128
        %304 = vxpose.xlu0.b32.cont [12/16] 0, 128
        %305 = vxpose.xlu0.b32.cont [13/16] 0, 128
        %306 = vxpose.xlu0.b32.cont [14/16] 0, 128
        %307 = vxpose.xlu0.b32.cont [15/16] 0, 128
        %308 = vxpose.xlu0.b32.end [16/16] 0, 128
        %v309 = vpop.trf.xlu0
        %v310 = vpop.trf.xlu0
        %v311 = vpop.trf.xlu0
        %v312 = vpop.trf.xlu0
        %v313 = vpop.trf.xlu0
        %v314 = vpop.trf.xlu0
        %v315 = vpop.trf.xlu0
        %v316 = vpop.trf.xlu0
        %v317 = vpop.trf.xlu0
        %v318 = vpop.trf.xlu0
        %v319 = vpop.trf.xlu0
        %v320 = vpop.trf.xlu0
        %v321 = vpop.trf.xlu0
        %v322 = vpop.trf.xlu0
        %v323 = vpop.trf.xlu0
        %v324 = vpop.trf.xlu0
        %325 = vst [vmem:[%s165] sm:$0x1] %v309
        %s327 = sshllo.u32 0, 2
        %v329 = vld [vmem:[#allocation2] sm:%s327]
        %s330 = sshllo.u32 0, 2
        %331 = vst [vmem:[%s150] sm:%s330] %v329
        %s333 = sshllo.u32 0, 2
        %v335 = vld [vmem:[#allocation5] sm:%s333]
        %s336 = sshllo.u32 0, 2
        %337 = vst [vmem:[%s157] sm:%s336] %v335
        %s338 = sand.u32 %s17, 1
        %s339 = sand.u32 %s17, 1
        %s340 = smul.addr %s339, 8
        %s341 = scalar_lea.vmem [#allocation1], %s340
        %s342 = sand.u32 %s27, 1
        %s343 = scalar_lea.sflag [#allocation4], %s342
        %s344 = sand.u32 %s27, 1
        %s345 = smul.addr %s344, 2
        %s346 = scalar_lea.vmem [#allocation3], %s345
        %s347 = sand.u32 %s55, 1
        %s348 = scalar_lea.sflag [#allocation7], %s347
        %s349 = sand.u32 %s55, 1
        %s350 = smul.addr %s349, 2
        %s351 = scalar_lea.vmem [#allocation6], %s350
        %s352 = smul.addr %s17, 8
        %s353 = scalar_lea.vmem %s1, %s352
        // Predicated region
        $region63: #{custom-call.8} parent=53 // pred_check
          _
        $region64: #{custom-call.8} parent=53 // pred_check_branch
          %355 = sbr.rel (0) target = $region66
        $region65: #{custom-call.8} parent=53 // pred_region
          // Predicated region
          $region67: #{custom-call.8} parent=65 // pred_check
            _
          $region68: #{custom-call.8} parent=65 // pred_check_branch
            %357 = sbr.rel (0) target = $region70
          $region69: #{custom-call.8} parent=65 // pred_region
            // Predicated region
            $region82: #{custom-call.8} parent=69 // pred_check
              _
            $region83: #{custom-call.8} parent=69 // pred_check_branch
              %372 = sbr.rel (0) target = $region85
            $region84: #{custom-call.8} parent=69 // pred_region
              loop: start=0, step=1, limit=1
              $region86: #{custom-call.8} parent=84 // loop_pre_header
                _
              $region87: #{custom-call.8} parent=84 // loop_header
                %s374 = sphi 0, %s378
                %p375 = scmp.ge.s32.totalorder %s374, 1
                %s379 = sphi %s341, %s341
                %s380 = sphi %s353, %s353
              $region88: #{custom-call.8} parent=84 // loop_header_branch
                %377 = sbr.rel (%p375) target = $region92
              $region89: #{custom-call.8} parent=84 // loop_body
                %v381 = vld [vmem:[%s379] sm:$0xff]
                %382 = vst [vmem:[%s380] sm:$0xff] %v381
              $region90: #{custom-call.8} parent=84 // loop_footer
                %s378 = sadd.s32 1, %s374
              $region91: #{custom-call.8} parent=84 // loop_footer_branch
                %373 = sbr.rel target = $region87
              $region92: #{custom-call.8} parent=84 // loop_exit
                _
            $region85: #{custom-call.8} parent=69 // pred_fallthru
              _
            // Predicated region
            $region93: #{custom-call.8} parent=69 // pred_check
              _
            $region94: #{custom-call.8} parent=69 // pred_check_branch
              %384 = sbr.rel target = $region96
            $region95: #{custom-call.8} parent=69 // pred_region
              _
            $region96: #{custom-call.8} parent=69 // pred_fallthru
              _
          $region70: #{custom-call.8} parent=65 // pred_fallthru
            _
          // Predicated region
          $region71: #{custom-call.8} parent=65 // pred_check
            _
          $region72: #{custom-call.8} parent=65 // pred_check_branch
            %359 = sbr.rel target = $region74
          $region73: #{custom-call.8} parent=65 // pred_region
            loop: start=0, step=1, limit=1
            $region75: #{custom-call.8} parent=73 // loop_pre_header
              _
            $region76: #{custom-call.8} parent=73 // loop_header
              %s362 = sphi 0, %s366
              %p363 = scmp.ge.s32.totalorder %s362, 1
              %s367 = sphi %s341, %s341
              %s368 = sphi %s353, %s353
            $region77: #{custom-call.8} parent=73 // loop_header_branch
              %365 = sbr.rel (%p363) target = $region81
            $region78: #{custom-call.8} parent=73 // loop_body
              %v369 = vld [vmem:[%s367] sm:$0xff]
              %370 = vst [vmem:[%s368] sm:$0xff] %v369
            $region79: #{custom-call.8} parent=73 // loop_footer
              %s366 = sadd.s32 1, %s362
            $region80: #{custom-call.8} parent=73 // loop_footer_branch
              %361 = sbr.rel target = $region76
            $region81: #{custom-call.8} parent=73 // loop_exit
              _
          $region74: #{custom-call.8} parent=65 // pred_fallthru
            _
        $region66: #{custom-call.8} parent=53 // pred_fallthru
          _
        %385 = vnop
        // Predicated region
        $region97: #{custom-call.8} parent=53 // pred_check
          %p386 = pneg %p37
        $region98: #{custom-call.8} parent=53 // pred_check_branch
          %388 = sbr.rel (%p386) target = $region100
        $region99: #{custom-call.8} parent=53 // pred_region
          %s389 = sshrl.u32 %s17, 3
          %s391 = ssub.s32 32, 32
          %392 = vsyncadd %s343, %s391
          %s393 = smul.addr %s389, 32
          %s394 = scalar_lea.hbm %s2, %s393
          %s396 = sshll.u32 %s346, 4
          %s397 = int_to_ptr.vmem [resolvable:$true] %s396
          %399 = dma.vmem_to_hbm [thread:$0]  %s397, 32, %s394, %s343
        $region100: #{custom-call.8} parent=53 // pred_fallthru
          _
        // Predicated region
        $region101: #{custom-call.8} parent=53 // pred_check
          %p400 = pneg %p65
        $region102: #{custom-call.8} parent=53 // pred_check_branch
          %402 = sbr.rel (%p400) target = $region104
        $region103: #{custom-call.8} parent=53 // pred_region
          %s403 = sshrl.u32 %s17, 3
          %s405 = ssub.s32 32, 32
          %406 = vsyncadd %s348, %s405
          %s407 = smul.addr %s403, 32
          %s408 = scalar_lea.hbm %s3, %s407
          %s410 = sshll.u32 %s351, 4
          %s411 = int_to_ptr.vmem [resolvable:$true] %s410
          %413 = dma.vmem_to_hbm [thread:$0]  %s411, 32, %s408, %s348
        $region104: #{custom-call.8} parent=53 // pred_fallthru
          _
      $region54: #{custom-call.8} parent=5 // pred_fallthru
        _
      %p414 = scmp.le.s32.totalorder 2, %s12
      // Predicated region
      $region105: #{custom-call.8} parent=5 // pred_check
        %p415 = pneg %p414
      $region106: #{custom-call.8} parent=5 // pred_check_branch
        %417 = sbr.rel (%p415) target = $region108
      $region107: #{custom-call.8} parent=5 // pred_region
        %s418 = ssub.s32 %s12, 2
        %s419 = sand.u32 %s18, 1
        %s420 = sand.u32 %s18, 1
        %s421 = smul.addr %s420, 8
        %s422 = scalar_lea.vmem [#allocation1], %s421
        // Predicated region
        $region109: #{custom-call.8} parent=107 // pred_check
          %p423 = pneg %p43
        $region110: #{custom-call.8} parent=107 // pred_check_branch
          %425 = sbr.rel (%p423) target = $region112
        $region111: #{custom-call.8} parent=107 // pred_region
          %s426 = sand.u32 %s28, 1
          %s427 = scalar_lea.sflag [#allocation4], %s426
          %s428 = sand.u32 %s28, 1
          %s429 = smul.addr %s428, 2
          %s430 = scalar_lea.vmem [#allocation3], %s429
          %431 = dma.done %s427, 32
        $region112: #{custom-call.8} parent=107 // pred_fallthru
          _
        // Predicated region
        $region113: #{custom-call.8} parent=107 // pred_check
          %p432 = pneg %p71
        $region114: #{custom-call.8} parent=107 // pred_check_branch
          %434 = sbr.rel (%p432) target = $region116
        $region115: #{custom-call.8} parent=107 // pred_region
          %s435 = sand.u32 %s56, 1
          %s436 = scalar_lea.sflag [#allocation7], %s435
          %s437 = sand.u32 %s56, 1
          %s438 = smul.addr %s437, 2
          %s439 = scalar_lea.vmem [#allocation6], %s438
          %440 = dma.done %s436, 32
        $region116: #{custom-call.8} parent=107 // pred_fallthru
          _
      $region108: #{custom-call.8} parent=5 // pred_fallthru
        _
    $region6: #{custom-call.8} parent=1 // loop_footer
      %s16 = sadd.s32 1, %s12
    $region7: #{custom-call.8} parent=1 // loop_footer_branch
      %11 = sbr.rel target = $region3
    $region8: #{custom-call.8} parent=1 // loop_exit
      _
    %441 = vsyncpa [#allocation4], 1
    %s442 = scalar_lea.sflag [#allocation4], 1
    %443 = vsyncpa %s442, 1
    %444 = vsyncpa [#allocation7], 1
    %s445 = scalar_lea.sflag [#allocation7], 1
    %446 = vsyncpa %s445, 1

// kernel: glow_density_forward.1
$region0: #{glow_density_forward.1}
  #allocation0 [shape = 'u32[]', space=smem, size = 0x4, offset = 0x4, fixed_abs, tag = 'smem constant byte address 0x4 - core index']
  #allocation1 [shape = 'u32[144,128]{1,0:T(1,128)}', space=vmem, size = 0x12000, scoped, tag = 'internal scratch']
  %s0 = inlined_call_operand.vmem [shape: f32[2,8,256], index: 0, kind: input, shape index: {}]
  %s1 = inlined_call_operand.vmem [shape: f32[3,8,72], index: 1, kind: input, shape index: {}]
  %s2 = inlined_call_operand.vmem [shape: f32[3,8,1], index: 2, kind: input, shape index: {}]
  %s3 = inlined_call_operand.vmem [shape: f32[9,1,256], index: 3, kind: input, shape index: {}]
  %s4 = inlined_call_operand.vmem [shape: f32[3,16,144], index: 4, kind: input, shape index: {}]
  %s5 = inlined_call_operand.vmem [shape: f32[3,16,1], index: 5, kind: input, shape index: {}]
  %s6 = inlined_call_operand.vmem [shape: f32[9,1,128], index: 6, kind: input, shape index: {}]
  %s7 = inlined_call_operand.vmem [shape: f32[256,128], index: 7, kind: input, shape index: {}]
  %s8 = inlined_call_operand.vmem [shape: f32[2,16,1], index: 8, kind: output, shape index: {}]
  %s9 = sld [smem:[#allocation0]]
  $region65: #{glow_density_forward.1} parent=0
    _
  %s11 = ssub.s32 1, %s9
  %s12 = scalar_select 0, %s11, %s9
  loop: start=0, step=1, limit=4
  $region2: #{glow_density_forward.1} parent=0 // loop_pre_header
    _
  $region3: #{glow_density_forward.1} parent=0 // loop_header
    %s14 = sphi 0, %s18
    %p15 = scmp.ge.s32.totalorder %s14, 4
    %s24 = sphi 0, %s26
    %s27 = sphi 0, %s24
    %s28 = sphi 0, %s27
    %s44 = sphi 0, %s28
    %s48 = sphi 0, %s48
    %s50 = sphi 0, %s48
    %s51 = sphi 0, %s50
    %s65 = sphi 0, %s51
    %s69 = sphi 0, %s69
    %s71 = sphi 0, %s69
    %s72 = sphi 0, %s71
    %s86 = sphi 0, %s72
    %s90 = sphi 0, %s90
    %s92 = sphi 0, %s90
    %s93 = sphi 0, %s92
    %s107 = sphi 0, %s93
    %s111 = sphi 0, %s111
    %s113 = sphi 0, %s111
    %s114 = sphi 0, %s113
    %s128 = sphi 0, %s114
    %s132 = sphi 0, %s132
    %s134 = sphi 0, %s132
    %s135 = sphi 0, %s134
    %s149 = sphi 0, %s135
    %s153 = sphi 0, %s153
    %s155 = sphi 0, %s153
    %s156 = sphi 0, %s155
    %s170 = sphi 0, %s156
    %s174 = sphi 0, %s174
    %s176 = sphi 0, %s174
    %s177 = sphi 0, %s176
    %s191 = sphi 0, %s177
    %s197 = sphi 0, %s199
    %s200 = sphi 0, %s197
    %s201 = sphi 0, %s200
    %s217 = sphi 0, %s201
  $region4: #{glow_density_forward.1} parent=0 // loop_header_branch
    %17 = sbr.rel (%p15) target = $region8
  $region5: #{glow_density_forward.1} parent=0 // loop_body
    %s19 = ssub.s32 %s14, 1
    %s20 = ssub.s32 %s14, 2
    %s21 = sadd.s32 %s14, 1
    %s22 = ssub.s32 %s14, %s21
    %p23 = scmp.eq.s32.totalorder %s22, 0
    %s25 = sadd.s32 %s24, 1
    %s26 = scalar_select %p23, %s24, %s25
    %p29 = pneg %p23
    %p30 = scmp.eq.s32.totalorder %s14, 1
    %p31 = por %p29, %p30
    %p32 = scmp.ne.s32.totalorder %s24, %s27
    %p33 = scmp.eq.s32.totalorder %s14, 0
    %p34 = por %p32, %p33
    %p35 = scmp.ne.s32.totalorder %s24, %s27
    %p36 = scmp.eq.s32.totalorder %s19, 1
    %p37 = por %p35, %p36
    %p38 = scmp.ne.s32.totalorder %s27, %s28
    %p39 = scmp.eq.s32.totalorder %s19, 0
    %p40 = por %p38, %p39
    %p41 = scmp.ne.s32.totalorder %s27, %s28
    %p42 = scmp.eq.s32.totalorder %s20, 1
    %p43 = por %p41, %p42
    %p45 = scmp.ne.s32.totalorder %s28, %s44
    %p46 = scmp.eq.s32.totalorder %s20, 0
    %p47 = por %p45, %p46
    %s49 = sadd.s32 %s48, 1
    %p52 = scmp.eq.s32.totalorder %s14, 1
    %p53 = scmp.ne.s32.totalorder %s48, %s50
    %p54 = scmp.eq.s32.totalorder %s14, 0
    %p55 = por %p53, %p54
    %p56 = scmp.ne.s32.totalorder %s48, %s50
    %p57 = scmp.eq.s32.totalorder %s19, 1
    %p58 = por %p56, %p57
    %p59 = scmp.ne.s32.totalorder %s50, %s51
    %p60 = scmp.eq.s32.totalorder %s19, 0
    %p61 = por %p59, %p60
    %p62 = scmp.ne.s32.totalorder %s50, %s51
    %p63 = scmp.eq.s32.totalorder %s20, 1
    %p64 = por %p62, %p63
    %p66 = scmp.ne.s32.totalorder %s51, %s65
    %p67 = scmp.eq.s32.totalorder %s20, 0
    %p68 = por %p66, %p67
    %s70 = sadd.s32 %s69, 1
    %p73 = scmp.eq.s32.totalorder %s14, 1
    %p74 = scmp.ne.s32.totalorder %s69, %s71
    %p75 = scmp.eq.s32.totalorder %s14, 0
    %p76 = por %p74, %p75
    %p77 = scmp.ne.s32.totalorder %s69, %s71
    %p78 = scmp.eq.s32.totalorder %s19, 1
    %p79 = por %p77, %p78
    %p80 = scmp.ne.s32.totalorder %s71, %s72
    %p81 = scmp.eq.s32.totalorder %s19, 0
    %p82 = por %p80, %p81
    %p83 = scmp.ne.s32.totalorder %s71, %s72
    %p84 = scmp.eq.s32.totalorder %s20, 1
    %p85 = por %p83, %p84
    %p87 = scmp.ne.s32.totalorder %s72, %s86
    %p88 = scmp.eq.s32.totalorder %s20, 0
    %p89 = por %p87, %p88
    %s91 = sadd.s32 %s90, 1
    %p94 = scmp.eq.s32.totalorder %s14, 1
    %p95 = scmp.ne.s32.totalorder %s90, %s92
    %p96 = scmp.eq.s32.totalorder %s14, 0
    %p97 = por %p95, %p96
    %p98 = scmp.ne.s32.totalorder %s90, %s92
    %p99 = scmp.eq.s32.totalorder %s19, 1
    %p100 = por %p98, %p99
    %p101 = scmp.ne.s32.totalorder %s92, %s93
    %p102 = scmp.eq.s32.totalorder %s19, 0
    %p103 = por %p101, %p102
    %p104 = scmp.ne.s32.totalorder %s92, %s93
    %p105 = scmp.eq.s32.totalorder %s20, 1
    %p106 = por %p104, %p105
    %p108 = scmp.ne.s32.totalorder %s93, %s107
    %p109 = scmp.eq.s32.totalorder %s20, 0
    %p110 = por %p108, %p109
    %s112 = sadd.s32 %s111, 1
    %p115 = scmp.eq.s32.totalorder %s14, 1
    %p116 = scmp.ne.s32.totalorder %s111, %s113
    %p117 = scmp.eq.s32.totalorder %s14, 0
    %p118 = por %p116, %p117
    %p119 = scmp.ne.s32.totalorder %s111, %s113
    %p120 = scmp.eq.s32.totalorder %s19, 1
    %p121 = por %p119, %p120
    %p122 = scmp.ne.s32.totalorder %s113, %s114
    %p123 = scmp.eq.s32.totalorder %s19, 0
    %p124 = por %p122, %p123
    %p125 = scmp.ne.s32.totalorder %s113, %s114
    %p126 = scmp.eq.s32.totalorder %s20, 1
    %p127 = por %p125, %p126
    %p129 = scmp.ne.s32.totalorder %s114, %s128
    %p130 = scmp.eq.s32.totalorder %s20, 0
    %p131 = por %p129, %p130
    %s133 = sadd.s32 %s132, 1
    %p136 = scmp.eq.s32.totalorder %s14, 1
    %p137 = scmp.ne.s32.totalorder %s132, %s134
    %p138 = scmp.eq.s32.totalorder %s14, 0
    %p139 = por %p137, %p138
    %p140 = scmp.ne.s32.totalorder %s132, %s134
    %p141 = scmp.eq.s32.totalorder %s19, 1
    %p142 = por %p140, %p141
    %p143 = scmp.ne.s32.totalorder %s134, %s135
    %p144 = scmp.eq.s32.totalorder %s19, 0
    %p145 = por %p143, %p144
    %p146 = scmp.ne.s32.totalorder %s134, %s135
    %p147 = scmp.eq.s32.totalorder %s20, 1
    %p148 = por %p146, %p147
    %p150 = scmp.ne.s32.totalorder %s135, %s149
    %p151 = scmp.eq.s32.totalorder %s20, 0
    %p152 = por %p150, %p151
    %s154 = sadd.s32 %s153, 1
    %p157 = scmp.eq.s32.totalorder %s14, 1
    %p158 = scmp.ne.s32.totalorder %s153, %s155
    %p159 = scmp.eq.s32.totalorder %s14, 0
    %p160 = por %p158, %p159
    %p161 = scmp.ne.s32.totalorder %s153, %s155
    %p162 = scmp.eq.s32.totalorder %s19, 1
    %p163 = por %p161, %p162
    %p164 = scmp.ne.s32.totalorder %s155, %s156
    %p165 = scmp.eq.s32.totalorder %s19, 0
    %p166 = por %p164, %p165
    %p167 = scmp.ne.s32.totalorder %s155, %s156
    %p168 = scmp.eq.s32.totalorder %s20, 1
    %p169 = por %p167, %p168
    %p171 = scmp.ne.s32.totalorder %s156, %s170
    %p172 = scmp.eq.s32.totalorder %s20, 0
    %p173 = por %p171, %p172
    %s175 = sadd.s32 %s174, 1
    %p178 = scmp.eq.s32.totalorder %s14, 1
    %p179 = scmp.ne.s32.totalorder %s174, %s176
    %p180 = scmp.eq.s32.totalorder %s14, 0
    %p181 = por %p179, %p180
    %p182 = scmp.ne.s32.totalorder %s174, %s176
    %p183 = scmp.eq.s32.totalorder %s19, 1
    %p184 = por %p182, %p183
    %p185 = scmp.ne.s32.totalorder %s176, %s177
    %p186 = scmp.eq.s32.totalorder %s19, 0
    %p187 = por %p185, %p186
    %p188 = scmp.ne.s32.totalorder %s176, %s177
    %p189 = scmp.eq.s32.totalorder %s20, 1
    %p190 = por %p188, %p189
    %p192 = scmp.ne.s32.totalorder %s177, %s191
    %p193 = scmp.eq.s32.totalorder %s20, 0
    %p194 = por %p192, %p193
    %s195 = ssub.s32 %s14, %s21
    %p196 = scmp.eq.s32.totalorder %s195, 0
    %s198 = sadd.s32 %s197, 1
    %s199 = scalar_select %p196, %s197, %s198
    %p202 = pneg %p196
    %p203 = scmp.eq.s32.totalorder %s14, 1
    %p204 = por %p202, %p203
    %p205 = scmp.ne.s32.totalorder %s197, %s200
    %p206 = scmp.eq.s32.totalorder %s14, 0
    %p207 = por %p205, %p206
    %p208 = scmp.ne.s32.totalorder %s197, %s200
    %p209 = scmp.eq.s32.totalorder %s19, 1
    %p210 = por %p208, %p209
    %p211 = scmp.ne.s32.totalorder %s200, %s201
    %p212 = scmp.eq.s32.totalorder %s19, 0
    %p213 = por %p211, %p212
    %p214 = scmp.ne.s32.totalorder %s200, %s201
    %p215 = scmp.eq.s32.totalorder %s20, 1
    %p216 = por %p214, %p215
    %p218 = scmp.ne.s32.totalorder %s201, %s217
    %p219 = scmp.eq.s32.totalorder %s20, 0
    %p220 = por %p218, %p219
    %p221 = scmp.le.s32.totalorder 1, %s14
    %p222 = scmp.lt.s32.totalorder %s14, 3
    %p223 = pnand %p221, %p222
    %p224 = pneg %p223
    // Predicated region
    $region9: #{glow_density_forward.1} parent=5 // pred_check
      _
    $region10: #{glow_density_forward.1} parent=5 // pred_check_branch
      %226 = sbr.rel (%p223) target = $region12
    $region11: #{glow_density_forward.1} parent=5 // pred_region
      %s227 = ssub.s32 %s14, 1
      // Predicated region
      $region13: #{glow_density_forward.1} parent=11 // pred_check
        %p228 = pneg %p61
      $region14: #{glow_density_forward.1} parent=11 // pred_check_branch
        %230 = sbr.rel (%p228) target = $region16
      $region15: #{glow_density_forward.1} parent=11 // pred_region
        _
      $region16: #{glow_density_forward.1} parent=11 // pred_fallthru
        _
      // Predicated region
      $region17: #{glow_density_forward.1} parent=11 // pred_check
        %p231 = pneg %p82
      $region18: #{glow_density_forward.1} parent=11 // pred_check_branch
        %233 = sbr.rel (%p231) target = $region20
      $region19: #{glow_density_forward.1} parent=11 // pred_region
        _
      $region20: #{glow_density_forward.1} parent=11 // pred_fallthru
        _
      // Predicated region
      $region21: #{glow_density_forward.1} parent=11 // pred_check
        %p234 = pneg %p103
      $region22: #{glow_density_forward.1} parent=11 // pred_check_branch
        %236 = sbr.rel (%p234) target = $region24
      $region23: #{glow_density_forward.1} parent=11 // pred_region
        _
      $region24: #{glow_density_forward.1} parent=11 // pred_fallthru
        _
      // Predicated region
      $region25: #{glow_density_forward.1} parent=11 // pred_check
        %p237 = pneg %p124
      $region26: #{glow_density_forward.1} parent=11 // pred_check_branch
        %239 = sbr.rel (%p237) target = $region28
      $region27: #{glow_density_forward.1} parent=11 // pred_region
        _
      $region28: #{glow_density_forward.1} parent=11 // pred_fallthru
        _
      // Predicated region
      $region29: #{glow_density_forward.1} parent=11 // pred_check
        %p240 = pneg %p145
      $region30: #{glow_density_forward.1} parent=11 // pred_check_branch
        %242 = sbr.rel (%p240) target = $region32
      $region31: #{glow_density_forward.1} parent=11 // pred_region
        _
      $region32: #{glow_density_forward.1} parent=11 // pred_fallthru
        _
      // Predicated region
      $region33: #{glow_density_forward.1} parent=11 // pred_check
        %p243 = pneg %p166
      $region34: #{glow_density_forward.1} parent=11 // pred_check_branch
        %245 = sbr.rel (%p243) target = $region36
      $region35: #{glow_density_forward.1} parent=11 // pred_region
        _
      $region36: #{glow_density_forward.1} parent=11 // pred_fallthru
        _
      // Predicated region
      $region37: #{glow_density_forward.1} parent=11 // pred_check
        %p246 = pneg %p187
      $region38: #{glow_density_forward.1} parent=11 // pred_check_branch
        %248 = sbr.rel (%p246) target = $region40
      $region39: #{glow_density_forward.1} parent=11 // pred_region
        _
      $region40: #{glow_density_forward.1} parent=11 // pred_fallthru
        _
    $region12: #{glow_density_forward.1} parent=5 // pred_fallthru
      _
    %p249 = scmp.lt.s32.totalorder %s14, 2
    // Predicated region
    $region41: #{glow_density_forward.1} parent=5 // pred_check
      %p250 = pneg %p249
    $region42: #{glow_density_forward.1} parent=5 // pred_check_branch
      %252 = sbr.rel (%p250) target = $region44
    $region43: #{glow_density_forward.1} parent=5 // pred_region
      // Predicated region
      $region45: #{glow_density_forward.1} parent=43 // pred_check
        %p253 = pneg %p34
      $region46: #{glow_density_forward.1} parent=43 // pred_check_branch
        %255 = sbr.rel (%p253) target = $region48
      $region47: #{glow_density_forward.1} parent=43 // pred_region
        %p256 = scmp.lt.s32.totalorder %s14, 1
        %s257 = scalar_select %p256, %s14, 1
        %s258 = smul.addr %s257, 2
        %s259 = smul.addr %s258, 8
        %s260 = scalar_lea.vmem %s0, %s259
      $region48: #{glow_density_forward.1} parent=43 // pred_fallthru
        _
    $region44: #{glow_density_forward.1} parent=5 // pred_fallthru
      _
    %p261 = scmp.le.s32.totalorder 1, %s14
    %p262 = scmp.lt.s32.totalorder %s14, 3
    %p263 = pnand %p261, %p262
    %p264 = pneg %p263
    // Predicated region
    $region49: #{glow_density_forward.1} parent=5 // pred_check
      _
    $region50: #{glow_density_forward.1} parent=5 // pred_check_branch
      %266 = sbr.rel (%p263) target = $region52
    $region51: #{glow_density_forward.1} parent=5 // pred_region
      %s267 = ssub.s32 %s14, 1
      %p268 = scmp.lt.s32.totalorder %s19, 1
      %s269 = scalar_select %p268, %s19, 1
      %s270 = smul.addr %s269, 2
      %s271 = smul.addr %s270, 8
      %s272 = scalar_lea.vmem %s0, %s271
      %p273 = pneg %p40
      %p274 = pneg %p37
      %p275 = pneg %p61
      %p276 = pneg %p58
      %p277 = pneg %p82
      %p278 = pneg %p79
      %p279 = pneg %p103
      %p280 = pneg %p100
      %p281 = pneg %p124
      %p282 = pneg %p121
      %p283 = pneg %p145
      %p284 = pneg %p142
      %p285 = pneg %p166
      %p286 = pneg %p163
      %p287 = pneg %p187
      %p288 = pneg %p184
      %p289 = pneg %p213
      %p290 = pneg %p210
      %p291 = scmp.lt.s32.totalorder %s19, 1
      %s292 = scalar_select %p291, %s19, 1
      %s293 = smul.addr %s292, 2
      %s294 = smul.addr %s293, 8
      %s295 = scalar_lea.vmem %s8, %s294
      %p296 = scmp.lt.s32.totalorder %s19, 1
      %s297 = scalar_select %p296, %s19, 1
      %s298 = smul.addr %s297, 2
      %s299 = smul.addr %s298, 8
      %s300 = scalar_lea.vmem %s0, %s299
      %p301 = scmp.lt.s32.totalorder %s19, 1
      %s302 = scalar_select %p301, %s19, 1
      %s303 = smul.addr %s302, 2
      %s304 = smul.addr %s303, 8
      %s305 = scalar_lea.vmem %s8, %s304
      %v306 = vld [vmem:[%s300] sm:$0xff]
      %v307 = vld [vmem:[%s300 + $0x8] sm:$0xff]
      %v308 = vld [vmem:[%s3] sm:$0x3]
      %s309 = scalar_lea.vmem %s3, 2
      %v310 = vld [vmem:[%s309] sm:$0x3]
      %s311 = scalar_lea.vmem %s3, 4
      %v312 = vld [vmem:[%s311] sm:$0x3]
      %s313 = scalar_lea.vmem %s3, 6
      %v314 = vld [vmem:[%s313] sm:$0x3]
      %s315 = scalar_lea.vmem %s3, 8
      %v316 = vld [vmem:[%s315] sm:$0x3]
      %s317 = scalar_lea.vmem %s3, 10
      %v318 = vld [vmem:[%s317] sm:$0x3]
      %s319 = scalar_lea.vmem %s3, 12
      %v320 = vld [vmem:[%s319] sm:$0x3]
      %s321 = scalar_lea.vmem %s3, 14
      %v322 = vld [vmem:[%s321] sm:$0x3]
      %s323 = scalar_lea.vmem %s3, 16
      %v324 = vld [vmem:[%s323] sm:$0x3]
      %325 = vrot.lane.b32.xlu0 %v306, 17
      %v326 = vpop.permute.xlu0 %325
      %327 = vrot.lane.b32.xlu0 %v307, 17
      %v328 = vpop.permute.xlu0 %327
      %v329 = vlaneseq
      %v330 = vand.u32 %v329, 127
      %vm331 = vcmp.lt.s32.totalorder %v330, 17
      %v332 = vsel %vm331, %v326, %v328
      %v333 = vsel %vm331, %v328, %v326
      %v335 = vlaneseq
      %v336 = vshrl.u32 %v335, 7
      %v337 = vsub.s32 0, %v336
      %v338 = vrot.slane %v308, %v337
      %v339 = vlaneseq
      %v340 = vshrl.u32 %v339, 7
      %v341 = vsub.s32 1, %v340
      %v342 = vrot.slane %v308, %v341
      %v345 = vmul.f32 %v333, %v338
      %v346 = vmul.f32 %v332, %v342
      %347 = vrot.lane.b32.xlu0 %v306, 16
      %v348 = vpop.permute.xlu0 %347
      %349 = vrot.lane.b32.xlu0 %v307, 16
      %v350 = vpop.permute.xlu0 %349
      %vm351 = vcmp.lt.s32.totalorder %v330, 16
      %v352 = vsel %vm351, %v348, %v350
      %v353 = vsel %vm351, %v350, %v348
      %v355 = vlaneseq
      %v356 = vshrl.u32 %v355, 7
      %v357 = vsub.s32 0, %v356
      %v358 = vrot.slane %v310, %v357
      %v359 = vlaneseq
      %v360 = vshrl.u32 %v359, 7
      %v361 = vsub.s32 1, %v360
      %v362 = vrot.slane %v310, %v361
      %v365 = vmul.f32 %v353, %v358
      %v366 = vmul.f32 %v352, %v362
      %367 = vrot.lane.b32.xlu0 %v306, 15
      %v368 = vpop.permute.xlu0 %367
      %369 = vrot.lane.b32.xlu0 %v307, 15
      %v370 = vpop.permute.xlu0 %369
      %vm371 = vcmp.lt.s32.totalorder %v330, 15
      %v372 = vsel %vm371, %v368, %v370
      %v373 = vsel %vm371, %v370, %v368
      %v375 = vlaneseq
      %v376 = vshrl.u32 %v375, 7
      %v377 = vsub.s32 0, %v376
      %v378 = vrot.slane %v312, %v377
      %v379 = vlaneseq
      %v380 = vshrl.u32 %v379, 7
      %v381 = vsub.s32 1, %v380
      %v382 = vrot.slane %v312, %v381
      %v385 = vmul.f32 %v373, %v378
      %v386 = vmul.f32 %v372, %v382
      %387 = vrot.lane.b32.xlu0 %v306, 1
      %v388 = vpop.permute.xlu0 %387
      %389 = vrot.lane.b32.xlu0 %v307, 1
      %v390 = vpop.permute.xlu0 %389
      %vm391 = vcmp.lt.s32.totalorder %v330, 1
      %v392 = vsel %vm391, %v388, %v390
      %v393 = vsel %vm391, %v390, %v388
      %v395 = vlaneseq
      %v396 = vshrl.u32 %v395, 7
      %v397 = vsub.s32 0, %v396
      %v398 = vrot.slane %v314, %v397
      %v399 = vlaneseq
      %v400 = vshrl.u32 %v399, 7
      %v401 = vsub.s32 1, %v400
      %v402 = vrot.slane %v314, %v401
      %v405 = vmul.f32 %v393, %v398
      %v406 = vmul.f32 %v392, %v402
      %v408 = vlaneseq
      %v409 = vshrl.u32 %v408, 7
      %v410 = vsub.s32 0, %v409
      %v411 = vrot.slane %v316, %v410
      %v412 = vlaneseq
      %v413 = vshrl.u32 %v412, 7
      %v414 = vsub.s32 1, %v413
      %v415 = vrot.slane %v316, %v414
      %v418 = vmul.f32 %v306, %v411
      %v419 = vmul.f32 %v307, %v415
      %420 = vrot.lane.b32.xlu0 %v306, 127
      %v421 = vpop.permute.xlu0 %420
      %422 = vrot.lane.b32.xlu0 %v307, 127
      %v423 = vpop.permute.xlu0 %422
      %vm424 = vcmp.lt.s32.totalorder %v330, 127
      %v425 = vsel %vm424, %v421, %v423
      %v426 = vsel %vm424, %v423, %v421
      %v428 = vlaneseq
      %v429 = vshrl.u32 %v428, 7
      %v430 = vsub.s32 0, %v429
      %v431 = vrot.slane %v318, %v430
      %v432 = vlaneseq
      %v433 = vshrl.u32 %v432, 7
      %v434 = vsub.s32 1, %v433
      %v435 = vrot.slane %v318, %v434
      %v438 = vmul.f32 %v425, %v431
      %v439 = vmul.f32 %v426, %v435
      %440 = vrot.lane.b32.xlu0 %v306, 113
      %v441 = vpop.permute.xlu0 %440
      %442 = vrot.lane.b32.xlu0 %v307, 113
      %v443 = vpop.permute.xlu0 %442
      %vm444 = vcmp.lt.s32.totalorder %v330, 113
      %v445 = vsel %vm444, %v441, %v443
      %v446 = vsel %vm444, %v443, %v441
      %v448 = vlaneseq
      %v449 = vshrl.u32 %v448, 7
      %v450 = vsub.s32 0, %v449
      %v451 = vrot.slane %v320, %v450
      %v452 = vlaneseq
      %v453 = vshrl.u32 %v452, 7
      %v454 = vsub.s32 1, %v453
      %v455 = vrot.slane %v320, %v454
      %v458 = vmul.f32 %v445, %v451
      %v459 = vmul.f32 %v446, %v455
      %460 = vrot.lane.b32.xlu0 %v306, 112
      %v461 = vpop.permute.xlu0 %460
      %462 = vrot.lane.b32.xlu0 %v307, 112
      %v463 = vpop.permute.xlu0 %462
      %vm464 = vcmp.lt.s32.totalorder %v330, 112
      %v465 = vsel %vm464, %v461, %v463
      %v466 = vsel %vm464, %v463, %v461
      %v468 = vlaneseq
      %v469 = vshrl.u32 %v468, 7
      %v470 = vsub.s32 0, %v469
      %v471 = vrot.slane %v322, %v470
      %v472 = vlaneseq
      %v473 = vshrl.u32 %v472, 7
      %v474 = vsub.s32 1, %v473
      %v475 = vrot.slane %v322, %v474
      %v478 = vmul.f32 %v465, %v471
      %v479 = vmul.f32 %v466, %v475
      %480 = vrot.lane.b32.xlu0 %v306, 111
      %v481 = vpop.permute.xlu0 %480
      %482 = vrot.lane.b32.xlu0 %v307, 111
      %v483 = vpop.permute.xlu0 %482
      %vm484 = vcmp.lt.s32.totalorder %v330, 111
      %v485 = vsel %vm484, %v481, %v483
      %v486 = vsel %vm484, %v483, %v481
      %v488 = vlaneseq
      %v489 = vshrl.u32 %v488, 7
      %v490 = vsub.s32 0, %v489
      %v491 = vrot.slane %v324, %v490
      %v492 = vlaneseq
      %v493 = vshrl.u32 %v492, 7
      %v494 = vsub.s32 1, %v493
      %v495 = vrot.slane %v324, %v494
      %v498 = vmul.f32 %v485, %v491
      %v499 = vmul.f32 %v486, %v495
      %v500 = vld [vmem:[%s1] sm:$0xff]
      %v501 = vld [vmem:[%s2] sm:$0xff]
      %503 = vset.pattern.permute.xlu0 0
      %504 = vperm.xlu0 %503, %v501
      %v505 = vpop.permute.xlu0 %504
      %vm507 = vcmask 588800
      %v509 = vsel %vm507, %v500, 0
      %511 = vmatprep.subr.mxu0 %v346
      %512 = vmatpush1.msra.mxu0 %v345
      %513 = vmatprep.subr.mxu0 %v366
      %514 = vmatpush1.msra.mxu0 %v365
      %515 = vmatprep.subr.mxu0 %v386
      %516 = vmatpush1.msra.mxu0 %v385
      %517 = vmatprep.subr.mxu0 %v406
      %518 = vmatpush1.msra.mxu0 %v405
      %519 = vmatprep.subr.mxu0 %v419
      %520 = vmatpush1.msra.mxu0 %v418
      %521 = vmatprep.subr.mxu0 %v439
      %522 = vmatpush1.msra.mxu0 %v438
      %523 = vmatprep.subr.mxu0 %v459
      %524 = vmatpush1.msra.mxu0 %v458
      %525 = vmatprep.subr.mxu0 %v479
      %526 = vmatpush1.msra.mxu0 %v478
      %527 = vmatprep.subr.mxu0 %v499
      %528 = vmatpush1.msra.mxu0 %v498
      %529 = vmatprep.subr.mxu0 0.0
      %530 = vmatpush1.msra.mxu0 0.0
      %531 = vmatprep.subr.mxu0 0.0
      %532 = vmatpush1.msra.mxu0 0.0
      %533 = vmatprep.subr.mxu0 0.0
      %534 = vmatpush1.msra.mxu0 0.0
      %535 = vmatprep.subr.mxu0 0.0
      %536 = vmatpush1.msra.mxu0 0.0
      %537 = vmatprep.subr.mxu0 0.0
      %538 = vmatpush1.msra.mxu0 0.0
      %539 = vmatprep.subr.mxu0 0.0
      %540 = vmatpush1.msra.mxu0 0.0
      %541 = vmatprep.subr.mxu0 0.0
      %542 = vmatpush1.msra.mxu0 0.0
      %543 = vmatprep.subr.mxu0 0.0
      %544 = vmatpush1.msra.mxu0 0.0
      %545 = vmatprep.subr.mxu0 0.0
      %546 = vmatpush1.msra.mxu0 0.0
      %547 = vmatprep.subr.mxu0 0.0
      %548 = vmatpush1.msra.mxu0 0.0
      %549 = vmatprep.subr.mxu0 0.0
      %550 = vmatpush1.msra.mxu0 0.0
      %551 = vmatprep.subr.mxu0 0.0
      %552 = vmatpush1.msra.mxu0 0.0
      %553 = vmatprep.subr.mxu0 0.0
      %554 = vmatpush1.msra.mxu0 0.0
      %555 = vmatprep.subr.mxu0 0.0
      %556 = vmatpush1.msra.mxu0 0.0
      %557 = vmatprep.subr.mxu0 0.0
      %558 = vmatpush1.msra.mxu0 0.0
      %559 = vmatprep.subr.mxu0 0.0
      %560 = vmatpush1.msra.mxu0 0.0
      %561 = vmatprep.subr.mxu0 0.0
      %562 = vmatpush1.msra.mxu0 0.0
      %563 = vmatprep.subr.mxu0 0.0
      %564 = vmatpush1.msra.mxu0 0.0
      %565 = vmatprep.subr.mxu0 0.0
      %566 = vmatpush1.msra.mxu0 0.0
      %567 = vmatprep.subr.mxu0 0.0
      %568 = vmatpush1.msra.mxu0 0.0
      %569 = vmatprep.subr.mxu0 0.0
      %570 = vmatpush1.msra.mxu0 0.0
      %571 = vmatprep.subr.mxu0 0.0
      %572 = vmatpush1.msra.mxu0 0.0
      %573 = vmatprep.subr.mxu0 0.0
      %574 = vmatpush1.msra.mxu0 0.0
      %575 = vmatprep.mubr.f32.mxu0 0.0
      %576 = vmatmul.mubr.f32.gmra.mrb[0].mxu0 %v509
      %v577 = vpop.f32.mrb[0].mxu0
      %v578 = vadd.f32 %v505, %v577
      %v579 = vpop.f32.mrb[0].mxu0
      %v580 = vadd.f32 %v505, %v579
      %581 = vdwg.mxu0
      %v582 = vmax.f32 %v578, 0.0
      %v583 = vmax.f32 %v580, 0.0
      %584 = vrot.lane.b32.xlu0 %v582, 17
      %v585 = vpop.permute.xlu0 %584
      %586 = vrot.lane.b32.xlu0 %v583, 17
      %v587 = vpop.permute.xlu0 %586
      %v588 = vsel %vm331, %v585, %v587
      %v589 = vsel %vm331, %v587, %v585
      %v590 = vmul.f32 %v589, %v338
      %v591 = vmul.f32 %v588, %v342
      %592 = vrot.lane.b32.xlu0 %v582, 16
      %v593 = vpop.permute.xlu0 %592
      %594 = vrot.lane.b32.xlu0 %v583, 16
      %v595 = vpop.permute.xlu0 %594
      %v596 = vsel %vm351, %v593, %v595
      %v597 = vsel %vm351, %v595, %v593
      %v598 = vmul.f32 %v597, %v358
      %v599 = vmul.f32 %v596, %v362
      %600 = vrot.lane.b32.xlu0 %v582, 15
      %v601 = vpop.permute.xlu0 %600
      %602 = vrot.lane.b32.xlu0 %v583, 15
      %v603 = vpop.permute.xlu0 %602
      %v604 = vsel %vm371, %v601, %v603
      %v605 = vsel %vm371, %v603, %v601
      %v606 = vmul.f32 %v605, %v378
      %v607 = vmul.f32 %v604, %v382
      %608 = vrot.lane.b32.xlu0 %v582, 1
      %v609 = vpop.permute.xlu0 %608
      %610 = vrot.lane.b32.xlu0 %v583, 1
      %v611 = vpop.permute.xlu0 %610
      %v612 = vsel %vm391, %v609, %v611
      %v613 = vsel %vm391, %v611, %v609
      %v614 = vmul.f32 %v613, %v398
      %v615 = vmul.f32 %v612, %v402
      %v616 = vmul.f32 %v582, %v411
      %v617 = vmul.f32 %v583, %v415
      %618 = vrot.lane.b32.xlu0 %v582, 127
      %v619 = vpop.permute.xlu0 %618
      %620 = vrot.lane.b32.xlu0 %v583, 127
      %v621 = vpop.permute.xlu0 %620
      %v622 = vsel %vm424, %v619, %v621
      %v623 = vsel %vm424, %v621, %v619
      %v624 = vmul.f32 %v622, %v431
      %v625 = vmul.f32 %v623, %v435
      %626 = vrot.lane.b32.xlu0 %v582, 113
      %v627 = vpop.permute.xlu0 %626
      %628 = vrot.lane.b32.xlu0 %v583, 113
      %v629 = vpop.permute.xlu0 %628
      %v630 = vsel %vm444, %v627, %v629
      %v631 = vsel %vm444, %v629, %v627
      %v632 = vmul.f32 %v630, %v451
      %v633 = vmul.f32 %v631, %v455
      %634 = vrot.lane.b32.xlu0 %v582, 112
      %v635 = vpop.permute.xlu0 %634
      %636 = vrot.lane.b32.xlu0 %v583, 112
      %v637 = vpop.permute.xlu0 %636
      %v638 = vsel %vm464, %v635, %v637
      %v639 = vsel %vm464, %v637, %v635
      %v640 = vmul.f32 %v638, %v471
      %v641 = vmul.f32 %v639, %v475
      %642 = vrot.lane.b32.xlu0 %v582, 111
      %v643 = vpop.permute.xlu0 %642
      %644 = vrot.lane.b32.xlu0 %v583, 111
      %v645 = vpop.permute.xlu0 %644
      %v646 = vsel %vm484, %v643, %v645
      %v647 = vsel %vm484, %v645, %v643
      %v648 = vmul.f32 %v646, %v491
      %v649 = vmul.f32 %v647, %v495
      %s650 = scalar_lea.vmem %s1, 8
      %v651 = vld [vmem:[%s650] sm:$0xff]
      %s652 = scalar_lea.vmem %s2, 8
      %v653 = vld [vmem:[%s652] sm:$0xff]
      %655 = vset.pattern.permute.xlu0 0
      %656 = vperm.xlu0 %655, %v653
      %v657 = vpop.permute.xlu0 %656
      %v660 = vsel %vm507, %v651, 0
      %662 = vmatprep.subr.mxu0 %v591
      %663 = vmatpush1.msra.mxu0 %v590
      %664 = vmatprep.subr.mxu0 %v599
      %665 = vmatpush1.msra.mxu0 %v598
      %666 = vmatprep.subr.mxu0 %v607
      %667 = vmatpush1.msra.mxu0 %v606
      %668 = vmatprep.subr.mxu0 %v615
      %669 = vmatpush1.msra.mxu0 %v614
      %670 = vmatprep.subr.mxu0 %v617
      %671 = vmatpush1.msra.mxu0 %v616
      %672 = vmatprep.subr.mxu0 %v625
      %673 = vmatpush1.msra.mxu0 %v624
      %674 = vmatprep.subr.mxu0 %v633
      %675 = vmatpush1.msra.mxu0 %v632
      %676 = vmatprep.subr.mxu0 %v641
      %677 = vmatpush1.msra.mxu0 %v640
      %678 = vmatprep.subr.mxu0 %v649
      %679 = vmatpush1.msra.mxu0 %v648
      %680 = vmatprep.subr.mxu0 0.0
      %681 = vmatpush1.msra.mxu0 0.0
      %682 = vmatprep.subr.mxu0 0.0
      %683 = vmatpush1.msra.mxu0 0.0
      %684 = vmatprep.subr.mxu0 0.0
      %685 = vmatpush1.msra.mxu0 0.0
      %686 = vmatprep.subr.mxu0 0.0
      %687 = vmatpush1.msra.mxu0 0.0
      %688 = vmatprep.subr.mxu0 0.0
      %689 = vmatpush1.msra.mxu0 0.0
      %690 = vmatprep.subr.mxu0 0.0
      %691 = vmatpush1.msra.mxu0 0.0
      %692 = vmatprep.subr.mxu0 0.0
      %693 = vmatpush1.msra.mxu0 0.0
      %694 = vmatprep.subr.mxu0 0.0
      %695 = vmatpush1.msra.mxu0 0.0
      %696 = vmatprep.subr.mxu0 0.0
      %697 = vmatpush1.msra.mxu0 0.0
      %698 = vmatprep.subr.mxu0 0.0
      %699 = vmatpush1.msra.mxu0 0.0
      %700 = vmatprep.subr.mxu0 0.0
      %701 = vmatpush1.msra.mxu0 0.0
      %702 = vmatprep.subr.mxu0 0.0
      %703 = vmatpush1.msra.mxu0 0.0
      %704 = vmatprep.subr.mxu0 0.0
      %705 = vmatpush1.msra.mxu0 0.0
      %706 = vmatprep.subr.mxu0 0.0
      %707 = vmatpush1.msra.mxu0 0.0
      %708 = vmatprep.subr.mxu0 0.0
      %709 = vmatpush1.msra.mxu0 0.0
      %710 = vmatprep.subr.mxu0 0.0
      %711 = vmatpush1.msra.mxu0 0.0
      %712 = vmatprep.subr.mxu0 0.0
      %713 = vmatpush1.msra.mxu0 0.0
      %714 = vmatprep.subr.mxu0 0.0
      %715 = vmatpush1.msra.mxu0 0.0
      %716 = vmatprep.subr.mxu0 0.0
      %717 = vmatpush1.msra.mxu0 0.0
      %718 = vmatprep.subr.mxu0 0.0
      %719 = vmatpush1.msra.mxu0 0.0
      %720 = vmatprep.subr.mxu0 0.0
      %721 = vmatpush1.msra.mxu0 0.0
      %722 = vmatprep.subr.mxu0 0.0
      %723 = vmatpush1.msra.mxu0 0.0
      %724 = vmatprep.subr.mxu0 0.0
      %725 = vmatpush1.msra.mxu0 0.0
      %726 = vmatprep.mubr.f32.mxu0 0.0
      %727 = vmatmul.mubr.f32.gmra.mrb[0].mxu0 %v660
      %v728 = vpop.f32.mrb[0].mxu0
      %v729 = vadd.f32 %v657, %v728
      %v730 = vpop.f32.mrb[0].mxu0
      %v731 = vadd.f32 %v657, %v730
      %732 = vdwg.mxu0
      %v733 = vmax.f32 %v729, 0.0
      %v734 = vmax.f32 %v731, 0.0
      %735 = vrot.lane.b32.xlu0 %v733, 17
      %v736 = vpop.permute.xlu0 %735
      %737 = vrot.lane.b32.xlu0 %v734, 17
      %v738 = vpop.permute.xlu0 %737
      %v739 = vsel %vm331, %v736, %v738
      %v740 = vsel %vm331, %v738, %v736
      %v741 = vmul.f32 %v740, %v338
      %v742 = vmul.f32 %v739, %v342
      %743 = vrot.lane.b32.xlu0 %v733, 16
      %v744 = vpop.permute.xlu0 %743
      %745 = vrot.lane.b32.xlu0 %v734, 16
      %v746 = vpop.permute.xlu0 %745
      %v747 = vsel %vm351, %v744, %v746
      %v748 = vsel %vm351, %v746, %v744
      %v749 = vmul.f32 %v748, %v358
      %v750 = vmul.f32 %v747, %v362
      %751 = vrot.lane.b32.xlu0 %v733, 15
      %v752 = vpop.permute.xlu0 %751
      %753 = vrot.lane.b32.xlu0 %v734, 15
      %v754 = vpop.permute.xlu0 %753
      %v755 = vsel %vm371, %v752, %v754
      %v756 = vsel %vm371, %v754, %v752
      %v757 = vmul.f32 %v756, %v378
      %v758 = vmul.f32 %v755, %v382
      %759 = vrot.lane.b32.xlu0 %v733, 1
      %v760 = vpop.permute.xlu0 %759
      %761 = vrot.lane.b32.xlu0 %v734, 1
      %v762 = vpop.permute.xlu0 %761
      %v763 = vsel %vm391, %v760, %v762
      %v764 = vsel %vm391, %v762, %v760
      %v765 = vmul.f32 %v764, %v398
      %v766 = vmul.f32 %v763, %v402
      %v767 = vmul.f32 %v733, %v411
      %v768 = vmul.f32 %v734, %v415
      %769 = vrot.lane.b32.xlu0 %v733, 127
      %v770 = vpop.permute.xlu0 %769
      %771 = vrot.lane.b32.xlu0 %v734, 127
      %v772 = vpop.permute.xlu0 %771
      %v773 = vsel %vm424, %v770, %v772
      %v774 = vsel %vm424, %v772, %v770
      %v775 = vmul.f32 %v773, %v431
      %v776 = vmul.f32 %v774, %v435
      %777 = vrot.lane.b32.xlu0 %v733, 113
      %v778 = vpop.permute.xlu0 %777
      %779 = vrot.lane.b32.xlu0 %v734, 113
      %v780 = vpop.permute.xlu0 %779
      %v781 = vsel %vm444, %v778, %v780
      %v782 = vsel %vm444, %v780, %v778
      %v783 = vmul.f32 %v781, %v451
      %v784 = vmul.f32 %v782, %v455
      %785 = vrot.lane.b32.xlu0 %v733, 112
      %v786 = vpop.permute.xlu0 %785
      %787 = vrot.lane.b32.xlu0 %v734, 112
      %v788 = vpop.permute.xlu0 %787
      %v789 = vsel %vm464, %v786, %v788
      %v790 = vsel %vm464, %v788, %v786
      %v791 = vmul.f32 %v789, %v471
      %v792 = vmul.f32 %v790, %v475
      %793 = vrot.lane.b32.xlu0 %v733, 111
      %v794 = vpop.permute.xlu0 %793
      %795 = vrot.lane.b32.xlu0 %v734, 111
      %v796 = vpop.permute.xlu0 %795
      %v797 = vsel %vm484, %v794, %v796
      %v798 = vsel %vm484, %v796, %v794
      %v799 = vmul.f32 %v797, %v491
      %v800 = vmul.f32 %v798, %v495
      %s801 = scalar_lea.vmem %s1, 16
      %v802 = vld [vmem:[%s801] sm:$0xff]
      %s803 = scalar_lea.vmem %s2, 16
      %v804 = vld [vmem:[%s803] sm:$0xff]
      %806 = vset.pattern.permute.xlu0 0
      %807 = vperm.xlu0 %806, %v804
      %v808 = vpop.permute.xlu0 %807
      %v811 = vsel %vm507, %v802, 0
      %813 = vmatprep.subr.mxu0 %v742
      %814 = vmatpush1.msra.mxu0 %v741
      %815 = vmatprep.subr.mxu0 %v750
      %816 = vmatpush1.msra.mxu0 %v749
      %817 = vmatprep.subr.mxu0 %v758
      %818 = vmatpush1.msra.mxu0 %v757
      %819 = vmatprep.subr.mxu0 %v766
      %820 = vmatpush1.msra.mxu0 %v765
      %821 = vmatprep.subr.mxu0 %v768
      %822 = vmatpush1.msra.mxu0 %v767
      %823 = vmatprep.subr.mxu0 %v776
      %824 = vmatpush1.msra.mxu0 %v775
      %825 = vmatprep.subr.mxu0 %v784
      %826 = vmatpush1.msra.mxu0 %v783
      %827 = vmatprep.subr.mxu0 %v792
      %828 = vmatpush1.msra.mxu0 %v791
      %829 = vmatprep.subr.mxu0 %v800
      %830 = vmatpush1.msra.mxu0 %v799
      %831 = vmatprep.subr.mxu0 0.0
      %832 = vmatpush1.msra.mxu0 0.0
      %833 = vmatprep.subr.mxu0 0.0
      %834 = vmatpush1.msra.mxu0 0.0
      %835 = vmatprep.subr.mxu0 0.0
      %836 = vmatpush1.msra.mxu0 0.0
      %837 = vmatprep.subr.mxu0 0.0
      %838 = vmatpush1.msra.mxu0 0.0
      %839 = vmatprep.subr.mxu0 0.0
      %840 = vmatpush1.msra.mxu0 0.0
      %841 = vmatprep.subr.mxu0 0.0
      %842 = vmatpush1.msra.mxu0 0.0
      %843 = vmatprep.subr.mxu0 0.0
      %844 = vmatpush1.msra.mxu0 0.0
      %845 = vmatprep.subr.mxu0 0.0
      %846 = vmatpush1.msra.mxu0 0.0
      %847 = vmatprep.subr.mxu0 0.0
      %848 = vmatpush1.msra.mxu0 0.0
      %849 = vmatprep.subr.mxu0 0.0
      %850 = vmatpush1.msra.mxu0 0.0
      %851 = vmatprep.subr.mxu0 0.0
      %852 = vmatpush1.msra.mxu0 0.0
      %853 = vmatprep.subr.mxu0 0.0
      %854 = vmatpush1.msra.mxu0 0.0
      %855 = vmatprep.subr.mxu0 0.0
      %856 = vmatpush1.msra.mxu0 0.0
      %857 = vmatprep.subr.mxu0 0.0
      %858 = vmatpush1.msra.mxu0 0.0
      %859 = vmatprep.subr.mxu0 0.0
      %860 = vmatpush1.msra.mxu0 0.0
      %861 = vmatprep.subr.mxu0 0.0
      %862 = vmatpush1.msra.mxu0 0.0
      %863 = vmatprep.subr.mxu0 0.0
      %864 = vmatpush1.msra.mxu0 0.0
      %865 = vmatprep.subr.mxu0 0.0
      %866 = vmatpush1.msra.mxu0 0.0
      %867 = vmatprep.subr.mxu0 0.0
      %868 = vmatpush1.msra.mxu0 0.0
      %869 = vmatprep.subr.mxu0 0.0
      %870 = vmatpush1.msra.mxu0 0.0
      %871 = vmatprep.subr.mxu0 0.0
      %872 = vmatpush1.msra.mxu0 0.0
      %873 = vmatprep.subr.mxu0 0.0
      %874 = vmatpush1.msra.mxu0 0.0
      %875 = vmatprep.subr.mxu0 0.0
      %876 = vmatpush1.msra.mxu0 0.0
      %877 = vmatprep.mubr.f32.mxu0 0.0
      %878 = vmatmul.mubr.f32.gmra.mrb[0].mxu0 %v811
      %v879 = vpop.f32.mrb[0].mxu0
      %v880 = vadd.f32 %v808, %v879
      %v881 = vpop.f32.mrb[0].mxu0
      %v882 = vadd.f32 %v808, %v881
      %883 = vdwg.mxu0
      %v884 = vmax.f32 %v880, 0.0
      %v885 = vmax.f32 %v882, 0.0
      %v886 = vld [vmem:[%s7] sm:$0xff]
      %v887 = vld [vmem:[%s7 + $0x8] sm:$0xff]
      %v888 = vld [vmem:[%s7 + $0x10] sm:$0xff]
      %v889 = vld [vmem:[%s7 + $0x18] sm:$0xff]
      %v890 = vld [vmem:[%s7 + $0x20] sm:$0xff]
      %v891 = vld [vmem:[%s7 + $0x28] sm:$0xff]
      %v892 = vld [vmem:[%s7 + $0x30] sm:$0xff]
      %v893 = vld [vmem:[%s7 + $0x38] sm:$0xff]
      %v894 = vld [vmem:[%s7 + $0x40] sm:$0xff]
      %v895 = vld [vmem:[%s7 + $0x48] sm:$0xff]
      %v896 = vld [vmem:[%s7 + $0x50] sm:$0xff]
      %v897 = vld [vmem:[%s7 + $0x58] sm:$0xff]
      %v898 = vld [vmem:[%s7 + $0x60] sm:$0xff]
      %v899 = vld [vmem:[%s7 + $0x68] sm:$0xff]
      %v900 = vld [vmem:[%s7 + $0x70] sm:$0xff]
      %v901 = vld [vmem:[%s7 + $0x78] sm:$0xff]
      %v902 = vld [vmem:[%s7 + $0x80] sm:$0xff]
      %v903 = vld [vmem:[%s7 + $0x88] sm:$0xff]
      %v904 = vld [vmem:[%s7 + $0x90] sm:$0xff]
      %v905 = vld [vmem:[%s7 + $0x98] sm:$0xff]
      %v906 = vld [vmem:[%s7 + $0xa0] sm:$0xff]
      %v907 = vld [vmem:[%s7 + $0xa8] sm:$0xff]
      %v908 = vld [vmem:[%s7 + $0xb0] sm:$0xff]
      %v909 = vld [vmem:[%s7 + $0xb8] sm:$0xff]
      %v910 = vld [vmem:[%s7 + $0xc0] sm:$0xff]
      %v911 = vld [vmem:[%s7 + $0xc8] sm:$0xff]
      %v912 = vld [vmem:[%s7 + $0xd0] sm:$0xff]
      %v913 = vld [vmem:[%s7 + $0xd8] sm:$0xff]
      %v914 = vld [vmem:[%s7 + $0xe0] sm:$0xff]
      %v915 = vld [vmem:[%s7 + $0xe8] sm:$0xff]
      %v916 = vld [vmem:[%s7 + $0xf0] sm:$0xff]
      %v917 = vld [vmem:[%s7 + $0xf8] sm:$0xff]
      %918 = vmatprep.subr.mxu0 0.0
      %919 = vmatpush1.msra.mxu0 %v886
      %920 = vmatprep.subr.mxu0 0.0
      %921 = vmatpush1.msra.mxu0 %v887
      %922 = vmatprep.subr.mxu0 0.0
      %923 = vmatpush1.msra.mxu0 %v888
      %924 = vmatprep.subr.mxu0 0.0
      %925 = vmatpush1.msra.mxu0 %v889
      %926 = vmatprep.subr.mxu0 0.0
      %927 = vmatpush1.msra.mxu0 %v890
      %928 = vmatprep.subr.mxu0 0.0
      %929 = vmatpush1.msra.mxu0 %v891
      %930 = vmatprep.subr.mxu0 0.0
      %931 = vmatpush1.msra.mxu0 %v892
      %932 = vmatprep.subr.mxu0 0.0
      %933 = vmatpush1.msra.mxu0 %v893
      %934 = vmatprep.subr.mxu0 0.0
      %935 = vmatpush1.msra.mxu0 %v894
      %936 = vmatprep.subr.mxu0 0.0
      %937 = vmatpush1.msra.mxu0 %v895
      %938 = vmatprep.subr.mxu0 0.0
      %939 = vmatpush1.msra.mxu0 %v896
      %940 = vmatprep.subr.mxu0 0.0
      %941 = vmatpush1.msra.mxu0 %v897
      %942 = vmatprep.subr.mxu0 0.0
      %943 = vmatpush1.msra.mxu0 %v898
      %944 = vmatprep.subr.mxu0 0.0
      %945 = vmatpush1.msra.mxu0 %v899
      %946 = vmatprep.subr.mxu0 0.0
      %947 = vmatpush1.msra.mxu0 %v900
      %948 = vmatprep.subr.mxu0 0.0
      %949 = vmatpush1.msra.mxu0 %v901
      %950 = vmatprep.subr.mxu0 0.0
      %951 = vmatpush1.msra.mxu0 %v902
      %952 = vmatprep.subr.mxu0 0.0
      %953 = vmatpush1.msra.mxu0 %v903
      %954 = vmatprep.subr.mxu0 0.0
      %955 = vmatpush1.msra.mxu0 %v904
      %956 = vmatprep.subr.mxu0 0.0
      %957 = vmatpush1.msra.mxu0 %v905
      %958 = vmatprep.subr.mxu0 0.0
      %959 = vmatpush1.msra.mxu0 %v906
      %960 = vmatprep.subr.mxu0 0.0
      %961 = vmatpush1.msra.mxu0 %v907
      %962 = vmatprep.subr.mxu0 0.0
      %963 = vmatpush1.msra.mxu0 %v908
      %964 = vmatprep.subr.mxu0 0.0
      %965 = vmatpush1.msra.mxu0 %v909
      %966 = vmatprep.subr.mxu0 0.0
      %967 = vmatpush1.msra.mxu0 %v910
      %968 = vmatprep.subr.mxu0 0.0
      %969 = vmatpush1.msra.mxu0 %v911
      %970 = vmatprep.subr.mxu0 0.0
      %971 = vmatpush1.msra.mxu0 %v912
      %972 = vmatprep.subr.mxu0 0.0
      %973 = vmatpush1.msra.mxu0 %v913
      %974 = vmatprep.subr.mxu0 0.0
      %975 = vmatpush1.msra.mxu0 %v914
      %976 = vmatprep.subr.mxu0 0.0
      %977 = vmatpush1.msra.mxu0 %v915
      %978 = vmatprep.subr.mxu0 0.0
      %979 = vmatpush1.msra.mxu0 %v916
      %980 = vmatprep.subr.mxu0 0.0
      %981 = vmatpush1.msra.mxu0 %v917
      %982 = vmatprep.mubr.f32.mxu0 %v885
      %983 = vmatmul.mubr.f32.gmra.mrb[0].mxu0 %v884
      %v984 = vpop.f32.mrb[0].mxu0
      %v985 = vadd.f32 0.0, %v984
      %v986 = vpop.f32.mrb[0].mxu0
      %987 = vdwg.mxu0
      %v988 = vld [vmem:[%s6] sm:$0x1]
      %s989 = scalar_lea.vmem %s6, 1
      %v990 = vld [vmem:[%s989] sm:$0x1]
      %s991 = scalar_lea.vmem %s6, 2
      %v992 = vld [vmem:[%s991] sm:$0x1]
      %s993 = scalar_lea.vmem %s6, 3
      %v994 = vld [vmem:[%s993] sm:$0x1]
      %s995 = scalar_lea.vmem %s6, 4
      %v996 = vld [vmem:[%s995] sm:$0x1]
      %s997 = scalar_lea.vmem %s6, 5
      %v998 = vld [vmem:[%s997] sm:$0x1]
      %s999 = scalar_lea.vmem %s6, 6
      %v1000 = vld [vmem:[%s999] sm:$0x1]
      %s1001 = scalar_lea.vmem %s6, 7
      %v1002 = vld [vmem:[%s1001] sm:$0x1]
      %s1003 = scalar_lea.vmem %s6, 8
      %v1004 = vld [vmem:[%s1003] sm:$0x1]
      %1005 = vrot.lane.b32.xlu0 %v985, 9
      %v1006 = vpop.permute.xlu0 %1005
      %1007 = vrot.lane.b32.xlu0 0.0, 9
      %v1008 = vpop.permute.xlu0 %1007
      %v1010 = vlaneseq
      %v1011 = vshrl.u32 %v1010, 7
      %v1012 = vsub.s32 0, %v1011
      %v1013 = vrot.slane %v988, %v1012
      %v1015 = vmul.f32 %v1006, %v1013
      %v1016 = vmul.f32 %v1008, %v1013
      %1017 = vrot.lane.b32.xlu0 %v985, 8
      %v1018 = vpop.permute.xlu0 %1017
      %1019 = vrot.lane.b32.xlu0 0.0, 8
      %v1020 = vpop.permute.xlu0 %1019
      %v1022 = vlaneseq
      %v1023 = vshrl.u32 %v1022, 7
      %v1024 = vsub.s32 0, %v1023
      %v1025 = vrot.slane %v990, %v1024
      %v1027 = vmul.f32 %v1018, %v1025
      %v1028 = vmul.f32 %v1020, %v1025
      %1029 = vrot.lane.b32.xlu0 %v985, 7
      %v1030 = vpop.permute.xlu0 %1029
      %1031 = vrot.lane.b32.xlu0 0.0, 7
      %v1032 = vpop.permute.xlu0 %1031
      %v1034 = vlaneseq
      %v1035 = vshrl.u32 %v1034, 7
      %v1036 = vsub.s32 0, %v1035
      %v1037 = vrot.slane %v992, %v1036
      %v1039 = vmul.f32 %v1030, %v1037
      %v1040 = vmul.f32 %v1032, %v1037
      %1041 = vrot.lane.b32.xlu0 %v985, 1
      %v1042 = vpop.permute.xlu0 %1041
      %1043 = vrot.lane.b32.xlu0 0.0, 1
      %v1044 = vpop.permute.xlu0 %1043
      %v1046 = vlaneseq
      %v1047 = vshrl.u32 %v1046, 7
      %v1048 = vsub.s32 0, %v1047
      %v1049 = vrot.slane %v994, %v1048
      %v1051 = vmul.f32 %v1042, %v1049
      %v1052 = vmul.f32 %v1044, %v1049
      %v1054 = vlaneseq
      %v1055 = vshrl.u32 %v1054, 7
      %v1056 = vsub.s32 0, %v1055
      %v1057 = vrot.slane %v996, %v1056
      %v1059 = vmul.f32 %v985, %v1057
      %v1060 = vmul.f32 %v1057, 0.0
      %1061 = vrot.lane.b32.xlu0 %v985, 127
      %v1062 = vpop.permute.xlu0 %1061
      %1063 = vrot.lane.b32.xlu0 0.0, 127
      %v1064 = vpop.permute.xlu0 %1063
      %v1066 = vlaneseq
      %v1067 = vshrl.u32 %v1066, 7
      %v1068 = vsub.s32 0, %v1067
      %v1069 = vrot.slane %v998, %v1068
      %v1071 = vmul.f32 %v1062, %v1069
      %v1072 = vmul.f32 %v1064, %v1069
      %1073 = vrot.lane.b32.xlu0 %v985, 121
      %v1074 = vpop.permute.xlu0 %1073
      %1075 = vrot.lane.b32.xlu0 0.0, 121
      %v1076 = vpop.permute.xlu0 %1075
      %v1078 = vlaneseq
      %v1079 = vshrl.u32 %v1078, 7
      %v1080 = vsub.s32 0, %v1079
      %v1081 = vrot.slane %v1000, %v1080
      %v1083 = vmul.f32 %v1074, %v1081
      %v1084 = vmul.f32 %v1076, %v1081
      %1085 = vrot.lane.b32.xlu0 %v985, 120
      %v1086 = vpop.permute.xlu0 %1085
      %1087 = vrot.lane.b32.xlu0 0.0, 120
      %v1088 = vpop.permute.xlu0 %1087
      %v1090 = vlaneseq
      %v1091 = vshrl.u32 %v1090, 7
      %v1092 = vsub.s32 0, %v1091
      %v1093 = vrot.slane %v1002, %v1092
      %v1095 = vmul.f32 %v1086, %v1093
      %v1096 = vmul.f32 %v1088, %v1093
      %1097 = vrot.lane.b32.xlu0 %v985, 119
      %v1098 = vpop.permute.xlu0 %1097
      %1099 = vrot.lane.b32.xlu0 0.0, 119
      %v1100 = vpop.permute.xlu0 %1099
      %v1102 = vlaneseq
      %v1103 = vshrl.u32 %v1102, 7
      %v1104 = vsub.s32 0, %v1103
      %v1105 = vrot.slane %v1004, %v1104
      %v1107 = vmul.f32 %v1098, %v1105
      %v1108 = vmul.f32 %v1100, %v1105
      %v1109 = vld [vmem:[%s4] sm:$0xff]
      %v1110 = vld [vmem:[%s4 + $0x8] sm:$0xff]
      %v1111 = vld [vmem:[%s4 + $0x10] sm:$0xff]
      %v1112 = vld [vmem:[%s4 + $0x18] sm:$0xff]
      %v1113 = vld [vmem:[%s5] sm:$0xff]
      %v1114 = vld [vmem:[%s5 + $0x8] sm:$0xff]
      %1116 = vset.pattern.permute.xlu0 0
      %1117 = vperm.xlu0 %1116, %v1113
      %v1118 = vpop.permute.xlu0 %1117
      %1121 = vset.pattern.permute.xlu0 0
      %1122 = vperm.xlu0 %1121, %v1114
      %v1123 = vpop.permute.xlu0 %1122
      %vm1125 = vcmask 130048
      %v1127 = vsel %vm1125, %v1110, 0
      %v1130 = vsel %vm1125, %v1112, 0
      %1132 = vmatprep.subr.mxu0 0.0
      %1133 = vmatpush1.msra.mxu0 %v1015
      %1134 = vmatprep.subr.mxu0 0.0
      %1135 = vmatpush1.msra.mxu0 %v1016
      %1136 = vmatprep.subr.mxu0 0.0
      %1137 = vmatpush1.msra.mxu0 %v1027
      %1138 = vmatprep.subr.mxu0 0.0
      %1139 = vmatpush1.msra.mxu0 %v1028
      %1140 = vmatprep.subr.mxu0 0.0
      %1141 = vmatpush1.msra.mxu0 %v1039
      %1142 = vmatprep.subr.mxu0 0.0
      %1143 = vmatpush1.msra.mxu0 %v1040
      %1144 = vmatprep.subr.mxu0 0.0
      %1145 = vmatpush1.msra.mxu0 %v1051
      %1146 = vmatprep.subr.mxu0 0.0
      %1147 = vmatpush1.msra.mxu0 %v1052
      %1148 = vmatprep.subr.mxu0 0.0
      %1149 = vmatpush1.msra.mxu0 %v1059
      %1150 = vmatprep.subr.mxu0 0.0
      %1151 = vmatpush1.msra.mxu0 %v1060
      %1152 = vmatprep.subr.mxu0 0.0
      %1153 = vmatpush1.msra.mxu0 %v1071
      %1154 = vmatprep.subr.mxu0 0.0
      %1155 = vmatpush1.msra.mxu0 %v1072
      %1156 = vmatprep.subr.mxu0 0.0
      %1157 = vmatpush1.msra.mxu0 %v1083
      %1158 = vmatprep.subr.mxu0 0.0
      %1159 = vmatpush1.msra.mxu0 %v1084
      %1160 = vmatprep.subr.mxu0 0.0
      %1161 = vmatpush1.msra.mxu0 %v1095
      %1162 = vmatprep.subr.mxu0 0.0
      %1163 = vmatpush1.msra.mxu0 %v1096
      %1164 = vmatprep.subr.mxu0 0.0
      %1165 = vmatpush1.msra.mxu0 %v1107
      %1166 = vmatprep.subr.mxu0 0.0
      %1167 = vmatpush1.msra.mxu0 %v1108
      %1168 = vmatprep.subr.mxu0 0.0
      %1169 = vmatpush1.msra.mxu0 0.0
      %1170 = vmatprep.subr.mxu0 0.0
      %1171 = vmatpush1.msra.mxu0 0.0
      %1172 = vmatprep.subr.mxu0 0.0
      %1173 = vmatpush1.msra.mxu0 0.0
      %1174 = vmatprep.subr.mxu0 0.0
      %1175 = vmatpush1.msra.mxu0 0.0
      %1176 = vmatprep.subr.mxu0 0.0
      %1177 = vmatpush1.msra.mxu0 0.0
      %1178 = vmatprep.subr.mxu0 0.0
      %1179 = vmatpush1.msra.mxu0 0.0
      %1180 = vmatprep.subr.mxu0 0.0
      %1181 = vmatpush1.msra.mxu0 0.0
      %1182 = vmatprep.subr.mxu0 0.0
      %1183 = vmatpush1.msra.mxu0 0.0
      %1184 = vmatprep.subr.mxu0 0.0
      %1185 = vmatpush1.msra.mxu0 0.0
      %1186 = vmatprep.subr.mxu0 0.0
      %1187 = vmatpush1.msra.mxu0 0.0
      %1188 = vmatprep.subr.mxu0 0.0
      %1189 = vmatpush1.msra.mxu0 0.0
      %1190 = vmatprep.subr.mxu0 0.0
      %1191 = vmatpush1.msra.mxu0 0.0
      %1192 = vmatprep.subr.mxu0 0.0
      %1193 = vmatpush1.msra.mxu0 0.0
      %1194 = vmatprep.subr.mxu0 0.0
      %1195 = vmatpush1.msra.mxu0 0.0
      %1196 = vmatprep.mubr.f32.mxu0 %v1127
      %1197 = vmatmul.mubr.f32.gmra.mrb[0].mxu0 %v1109
      %v1198 = vpop.f32.mrb[0].mxu0
      %v1199 = vadd.f32 %v1118, %v1198
      %v1200 = vpop.f32.mrb[0].mxu0
      %1201 = vmatprep.mubr.f32.mxu0 %v1130
      %1202 = vmatmul.mubr.f32.gmra.mrb[0].mxu0 %v1111
      %v1203 = vpop.f32.mrb[0].mxu0
      %v1204 = vadd.f32 %v1123, %v1203
      %v1205 = vpop.f32.mrb[0].mxu0
      %1206 = vdwg.mxu0
      %v1207 = vmax.f32 %v1199, 0.0
      %v1208 = vmax.f32 %v1204, 0.0
      %1209 = vrot.lane.b32.xlu0 %v1207, 9
      %v1210 = vpop.permute.xlu0 %1209
      %1211 = vrot.lane.b32.xlu0 %v1208, 9
      %v1212 = vpop.permute.xlu0 %1211
      %v1213 = vmul.f32 %v1210, %v1013
      %v1214 = vmul.f32 %v1212, %v1013
      %1215 = vrot.lane.b32.xlu0 %v1207, 8
      %v1216 = vpop.permute.xlu0 %1215
      %1217 = vrot.lane.b32.xlu0 %v1208, 8
      %v1218 = vpop.permute.xlu0 %1217
      %v1219 = vmul.f32 %v1216, %v1025
      %v1220 = vmul.f32 %v1218, %v1025
      %1221 = vrot.lane.b32.xlu0 %v1207, 7
      %v1222 = vpop.permute.xlu0 %1221
      %1223 = vrot.lane.b32.xlu0 %v1208, 7
      %v1224 = vpop.permute.xlu0 %1223
      %v1225 = vmul.f32 %v1222, %v1037
      %v1226 = vmul.f32 %v1224, %v1037
      %1227 = vrot.lane.b32.xlu0 %v1207, 1
      %v1228 = vpop.permute.xlu0 %1227
      %1229 = vrot.lane.b32.xlu0 %v1208, 1
      %v1230 = vpop.permute.xlu0 %1229
      %v1231 = vmul.f32 %v1228, %v1049
      %v1232 = vmul.f32 %v1230, %v1049
      %v1233 = vmul.f32 %v1207, %v1057
      %v1234 = vmul.f32 %v1208, %v1057
      %1235 = vrot.lane.b32.xlu0 %v1207, 127
      %v1236 = vpop.permute.xlu0 %1235
      %1237 = vrot.lane.b32.xlu0 %v1208, 127
      %v1238 = vpop.permute.xlu0 %1237
      %v1239 = vmul.f32 %v1236, %v1069
      %v1240 = vmul.f32 %v1238, %v1069
      %1241 = vrot.lane.b32.xlu0 %v1207, 121
      %v1242 = vpop.permute.xlu0 %1241
      %1243 = vrot.lane.b32.xlu0 %v1208, 121
      %v1244 = vpop.permute.xlu0 %1243
      %v1245 = vmul.f32 %v1242, %v1081
      %v1246 = vmul.f32 %v1244, %v1081
      %1247 = vrot.lane.b32.xlu0 %v1207, 120
      %v1248 = vpop.permute.xlu0 %1247
      %1249 = vrot.lane.b32.xlu0 %v1208, 120
      %v1250 = vpop.permute.xlu0 %1249
      %v1251 = vmul.f32 %v1248, %v1093
      %v1252 = vmul.f32 %v1250, %v1093
      %1253 = vrot.lane.b32.xlu0 %v1207, 119
      %v1254 = vpop.permute.xlu0 %1253
      %1255 = vrot.lane.b32.xlu0 %v1208, 119
      %v1256 = vpop.permute.xlu0 %1255
      %v1257 = vmul.f32 %v1254, %v1105
      %v1258 = vmul.f32 %v1256, %v1105
      %s1259 = scalar_lea.vmem %s4, 32
      %v1260 = vld [vmem:[%s1259] sm:$0xff]
      %v1261 = vld [vmem:[%s1259 + $0x8] sm:$0xff]
      %v1262 = vld [vmem:[%s1259 + $0x10] sm:$0xff]
      %v1263 = vld [vmem:[%s1259 + $0x18] sm:$0xff]
      %s1264 = scalar_lea.vmem %s5, 16
      %v1265 = vld [vmem:[%s1264] sm:$0xff]
      %v1266 = vld [vmem:[%s1264 + $0x8] sm:$0xff]
      %1268 = vset.pattern.permute.xlu0 0
      %1269 = vperm.xlu0 %1268, %v1265
      %v1270 = vpop.permute.xlu0 %1269
      %1273 = vset.pattern.permute.xlu0 0
      %1274 = vperm.xlu0 %1273, %v1266
      %v1275 = vpop.permute.xlu0 %1274
      %v1278 = vsel %vm1125, %v1261, 0
      %v1281 = vsel %vm1125, %v1263, 0
      %1283 = vmatprep.subr.mxu0 0.0
      %1284 = vmatpush1.msra.mxu0 %v1213
      %1285 = vmatprep.subr.mxu0 0.0
      %1286 = vmatpush1.msra.mxu0 %v1214
      %1287 = vmatprep.subr.mxu0 0.0
      %1288 = vmatpush1.msra.mxu0 %v1219
      %1289 = vmatprep.subr.mxu0 0.0
      %1290 = vmatpush1.msra.mxu0 %v1220
      %1291 = vmatprep.subr.mxu0 0.0
      %1292 = vmatpush1.msra.mxu0 %v1225
      %1293 = vmatprep.subr.mxu0 0.0
      %1294 = vmatpush1.msra.mxu0 %v1226
      %1295 = vmatprep.subr.mxu0 0.0
      %1296 = vmatpush1.msra.mxu0 %v1231
      %1297 = vmatprep.subr.mxu0 0.0
      %1298 = vmatpush1.msra.mxu0 %v1232
      %1299 = vmatprep.subr.mxu0 0.0
      %1300 = vmatpush1.msra.mxu0 %v1233
      %1301 = vmatprep.subr.mxu0 0.0
      %1302 = vmatpush1.msra.mxu0 %v1234
      %1303 = vmatprep.subr.mxu0 0.0
      %1304 = vmatpush1.msra.mxu0 %v1239
      %1305 = vmatprep.subr.mxu0 0.0
      %1306 = vmatpush1.msra.mxu0 %v1240
      %1307 = vmatprep.subr.mxu0 0.0
      %1308 = vmatpush1.msra.mxu0 %v1245
      %1309 = vmatprep.subr.mxu0 0.0
      %1310 = vmatpush1.msra.mxu0 %v1246
      %1311 = vmatprep.subr.mxu0 0.0
      %1312 = vmatpush1.msra.mxu0 %v1251
      %1313 = vmatprep.subr.mxu0 0.0
      %1314 = vmatpush1.msra.mxu0 %v1252
      %1315 = vmatprep.subr.mxu0 0.0
      %1316 = vmatpush1.msra.mxu0 %v1257
      %1317 = vmatprep.subr.mxu0 0.0
      %1318 = vmatpush1.msra.mxu0 %v1258
      %1319 = vmatprep.subr.mxu0 0.0
      %1320 = vmatpush1.msra.mxu0 0.0
      %1321 = vmatprep.subr.mxu0 0.0
      %1322 = vmatpush1.msra.mxu0 0.0
      %1323 = vmatprep.subr.mxu0 0.0
      %1324 = vmatpush1.msra.mxu0 0.0
      %1325 = vmatprep.subr.mxu0 0.0
      %1326 = vmatpush1.msra.mxu0 0.0
      %1327 = vmatprep.subr.mxu0 0.0
      %1328 = vmatpush1.msra.mxu0 0.0
      %1329 = vmatprep.subr.mxu0 0.0
      %1330 = vmatpush1.msra.mxu0 0.0
      %1331 = vmatprep.subr.mxu0 0.0
      %1332 = vmatpush1.msra.mxu0 0.0
      %1333 = vmatprep.subr.mxu0 0.0
      %1334 = vmatpush1.msra.mxu0 0.0
      %1335 = vmatprep.subr.mxu0 0.0
      %1336 = vmatpush1.msra.mxu0 0.0
      %1337 = vmatprep.subr.mxu0 0.0
      %1338 = vmatpush1.msra.mxu0 0.0
      %1339 = vmatprep.subr.mxu0 0.0
      %1340 = vmatpush1.msra.mxu0 0.0
      %1341 = vmatprep.subr.mxu0 0.0
      %1342 = vmatpush1.msra.mxu0 0.0
      %1343 = vmatprep.subr.mxu0 0.0
      %1344 = vmatpush1.msra.mxu0 0.0
      %1345 = vmatprep.subr.mxu0 0.0
      %1346 = vmatpush1.msra.mxu0 0.0
      %1347 = vmatprep.mubr.f32.mxu0 %v1278
      %1348 = vmatmul.mubr.f32.gmra.mrb[0].mxu0 %v1260
      %v1349 = vpop.f32.mrb[0].mxu0
      %v1350 = vadd.f32 %v1270, %v1349
      %v1351 = vpop.f32.mrb[0].mxu0
      %1352 = vmatprep.mubr.f32.mxu0 %v1281
      %1353 = vmatmul.mubr.f32.gmra.mrb[0].mxu0 %v1262
      %v1354 = vpop.f32.mrb[0].mxu0
      %v1355 = vadd.f32 %v1275, %v1354
      %v1356 = vpop.f32.mrb[0].mxu0
      %1357 = vdwg.mxu0
      %v1358 = vmax.f32 %v1350, 0.0
      %v1359 = vmax.f32 %v1355, 0.0
      %1360 = vrot.lane.b32.xlu0 %v1358, 9
      %v1361 = vpop.permute.xlu0 %1360
      %1362 = vrot.lane.b32.xlu0 %v1359, 9
      %v1363 = vpop.permute.xlu0 %1362
      %v1364 = vmul.f32 %v1361, %v1013
      %v1365 = vmul.f32 %v1363, %v1013
      %1366 = vrot.lane.b32.xlu0 %v1358, 8
      %v1367 = vpop.permute.xlu0 %1366
      %1368 = vrot.lane.b32.xlu0 %v1359, 8
      %v1369 = vpop.permute.xlu0 %1368
      %v1370 = vmul.f32 %v1367, %v1025
      %v1371 = vmul.f32 %v1369, %v1025
      %1372 = vrot.lane.b32.xlu0 %v1358, 7
      %v1373 = vpop.permute.xlu0 %1372
      %1374 = vrot.lane.b32.xlu0 %v1359, 7
      %v1375 = vpop.permute.xlu0 %1374
      %v1376 = vmul.f32 %v1373, %v1037
      %v1377 = vmul.f32 %v1375, %v1037
      %1378 = vrot.lane.b32.xlu0 %v1358, 1
      %v1379 = vpop.permute.xlu0 %1378
      %1380 = vrot.lane.b32.xlu0 %v1359, 1
      %v1381 = vpop.permute.xlu0 %1380
      %v1382 = vmul.f32 %v1379, %v1049
      %v1383 = vmul.f32 %v1381, %v1049
      %v1384 = vmul.f32 %v1358, %v1057
      %v1385 = vmul.f32 %v1359, %v1057
      %1386 = vrot.lane.b32.xlu0 %v1358, 127
      %v1387 = vpop.permute.xlu0 %1386
      %1388 = vrot.lane.b32.xlu0 %v1359, 127
      %v1389 = vpop.permute.xlu0 %1388
      %v1390 = vmul.f32 %v1387, %v1069
      %v1391 = vmul.f32 %v1389, %v1069
      %1392 = vrot.lane.b32.xlu0 %v1358, 121
      %v1393 = vpop.permute.xlu0 %1392
      %1394 = vrot.lane.b32.xlu0 %v1359, 121
      %v1395 = vpop.permute.xlu0 %1394
      %v1396 = vmul.f32 %v1393, %v1081
      %v1397 = vmul.f32 %v1395, %v1081
      %1398 = vrot.lane.b32.xlu0 %v1358, 120
      %v1399 = vpop.permute.xlu0 %1398
      %1400 = vrot.lane.b32.xlu0 %v1359, 120
      %v1401 = vpop.permute.xlu0 %1400
      %v1402 = vmul.f32 %v1399, %v1093
      %v1403 = vmul.f32 %v1401, %v1093
      %1404 = vrot.lane.b32.xlu0 %v1358, 119
      %v1405 = vpop.permute.xlu0 %1404
      %1406 = vrot.lane.b32.xlu0 %v1359, 119
      %v1407 = vpop.permute.xlu0 %1406
      %v1408 = vmul.f32 %v1405, %v1105
      %v1409 = vmul.f32 %v1407, %v1105
      %s1410 = scalar_lea.vmem %s4, 64
      %v1411 = vld [vmem:[%s1410] sm:$0xff]
      %v1412 = vld [vmem:[%s1410 + $0x8] sm:$0xff]
      %v1413 = vld [vmem:[%s1410 + $0x10] sm:$0xff]
      %v1414 = vld [vmem:[%s1410 + $0x18] sm:$0xff]
      %s1415 = scalar_lea.vmem %s5, 32
      %v1416 = vld [vmem:[%s1415] sm:$0xff]
      %v1417 = vld [vmem:[%s1415 + $0x8] sm:$0xff]
      %1419 = vset.pattern.permute.xlu0 0
      %1420 = vperm.xlu0 %1419, %v1416
      %v1421 = vpop.permute.xlu0 %1420
      %1424 = vset.pattern.permute.xlu0 0
      %1425 = vperm.xlu0 %1424, %v1417
      %v1426 = vpop.permute.xlu0 %1425
      %v1429 = vsel %vm1125, %v1412, 0
      %v1432 = vsel %vm1125, %v1414, 0
      %1434 = vmatprep.subr.mxu0 0.0
      %1435 = vmatpush1.msra.mxu0 %v1364
      %1436 = vmatprep.subr.mxu0 0.0
      %1437 = vmatpush1.msra.mxu0 %v1365
      %1438 = vmatprep.subr.mxu0 0.0
      %1439 = vmatpush1.msra.mxu0 %v1370
      %1440 = vmatprep.subr.mxu0 0.0
      %1441 = vmatpush1.msra.mxu0 %v1371
      %1442 = vmatprep.subr.mxu0 0.0
      %1443 = vmatpush1.msra.mxu0 %v1376
      %1444 = vmatprep.subr.mxu0 0.0
      %1445 = vmatpush1.msra.mxu0 %v1377
      %1446 = vmatprep.subr.mxu0 0.0
      %1447 = vmatpush1.msra.mxu0 %v1382
      %1448 = vmatprep.subr.mxu0 0.0
      %1449 = vmatpush1.msra.mxu0 %v1383
      %1450 = vmatprep.subr.mxu0 0.0
      %1451 = vmatpush1.msra.mxu0 %v1384
      %1452 = vmatprep.subr.mxu0 0.0
      %1453 = vmatpush1.msra.mxu0 %v1385
      %1454 = vmatprep.subr.mxu0 0.0
      %1455 = vmatpush1.msra.mxu0 %v1390
      %1456 = vmatprep.subr.mxu0 0.0
      %1457 = vmatpush1.msra.mxu0 %v1391
      %1458 = vmatprep.subr.mxu0 0.0
      %1459 = vmatpush1.msra.mxu0 %v1396
      %1460 = vmatprep.subr.mxu0 0.0
      %1461 = vmatpush1.msra.mxu0 %v1397
      %1462 = vmatprep.subr.mxu0 0.0
      %1463 = vmatpush1.msra.mxu0 %v1402
      %1464 = vmatprep.subr.mxu0 0.0
      %1465 = vmatpush1.msra.mxu0 %v1403
      %1466 = vmatprep.subr.mxu0 0.0
      %1467 = vmatpush1.msra.mxu0 %v1408
      %1468 = vmatprep.subr.mxu0 0.0
      %1469 = vmatpush1.msra.mxu0 %v1409
      %1470 = vmatprep.subr.mxu0 0.0
      %1471 = vmatpush1.msra.mxu0 0.0
      %1472 = vmatprep.subr.mxu0 0.0
      %1473 = vmatpush1.msra.mxu0 0.0
      %1474 = vmatprep.subr.mxu0 0.0
      %1475 = vmatpush1.msra.mxu0 0.0
      %1476 = vmatprep.subr.mxu0 0.0
      %1477 = vmatpush1.msra.mxu0 0.0
      %1478 = vmatprep.subr.mxu0 0.0
      %1479 = vmatpush1.msra.mxu0 0.0
      %1480 = vmatprep.subr.mxu0 0.0
      %1481 = vmatpush1.msra.mxu0 0.0
      %1482 = vmatprep.subr.mxu0 0.0
      %1483 = vmatpush1.msra.mxu0 0.0
      %1484 = vmatprep.subr.mxu0 0.0
      %1485 = vmatpush1.msra.mxu0 0.0
      %1486 = vmatprep.subr.mxu0 0.0
      %1487 = vmatpush1.msra.mxu0 0.0
      %1488 = vmatprep.subr.mxu0 0.0
      %1489 = vmatpush1.msra.mxu0 0.0
      %1490 = vmatprep.subr.mxu0 0.0
      %1491 = vmatpush1.msra.mxu0 0.0
      %1492 = vmatprep.subr.mxu0 0.0
      %1493 = vmatpush1.msra.mxu0 0.0
      %1494 = vmatprep.subr.mxu0 0.0
      %1495 = vmatpush1.msra.mxu0 0.0
      %1496 = vmatprep.subr.mxu0 0.0
      %1497 = vmatpush1.msra.mxu0 0.0
      %1498 = vmatprep.mubr.f32.mxu0 %v1429
      %1499 = vmatmul.mubr.f32.gmra.mrb[0].mxu0 %v1411
      %v1500 = vpop.f32.mrb[0].mxu0
      %v1501 = vadd.f32 %v1421, %v1500
      %v1502 = vpop.f32.mrb[0].mxu0
      %1503 = vmatprep.mubr.f32.mxu0 %v1432
      %1504 = vmatmul.mubr.f32.gmra.mrb[0].mxu0 %v1413
      %v1505 = vpop.f32.mrb[0].mxu0
      %v1506 = vadd.f32 %v1426, %v1505
      %v1507 = vpop.f32.mrb[0].mxu0
      %1508 = vdwg.mxu0
      %v1509 = vmax.f32 %v1501, 0.0
      %v1510 = vmax.f32 %v1506, 0.0
      %vm1511 = vcmask 523264
      %v1512 = vsel %vm1511, %v1509, 0.0
      %1513 = vadd.xlane.f32.xlu0 %v1512
      %v1514 = vpop.xlane.xlu0 %1513
      %v1515 = vsel %vm1511, %v1510, 0.0
      %1516 = vadd.xlane.f32.xlu0 %v1515
      %v1517 = vpop.xlane.xlu0 %1516
      %v1518 = vrcp.pop 64.0
      %v1519 = vmul.f32 %v1514, %v1518
      %v1520 = vmul.f32 %v1517, %v1518
      %vm1521 = vcmask 7168
      %1522 = vst.msk [vmem:[%s305] sm:$0xff] %vm1521, %v1519
      %1523 = vst.msk [vmem:[%s305 + $0x8] sm:$0xff] %vm1521, %v1520
      %p1524 = scmp.lt.s32.totalorder %s19, 1
      %s1525 = scalar_select %p1524, %s19, 1
      %s1526 = smul.addr %s1525, 2
      %s1527 = smul.addr %s1526, 8
      %s1528 = scalar_lea.vmem %s8, %s1527
      // Predicated region
      $region53: #{glow_density_forward.1} parent=51 // pred_check
        %p1529 = pneg %p210
      $region54: #{glow_density_forward.1} parent=51 // pred_check_branch
        %1531 = sbr.rel (%p1529) target = $region56
      $region55: #{glow_density_forward.1} parent=51 // pred_region
        _
      $region56: #{glow_density_forward.1} parent=51 // pred_fallthru
        _
    $region52: #{glow_density_forward.1} parent=5 // pred_fallthru
      _
    %p1532 = scmp.le.s32.totalorder 2, %s14
    // Predicated region
    $region57: #{glow_density_forward.1} parent=5 // pred_check
      %p1533 = pneg %p1532
    $region58: #{glow_density_forward.1} parent=5 // pred_check_branch
      %1535 = sbr.rel (%p1533) target = $region60
    $region59: #{glow_density_forward.1} parent=5 // pred_region
      %s1536 = ssub.s32 %s14, 2
      // Predicated region
      $region61: #{glow_density_forward.1} parent=59 // pred_check
        %p1537 = pneg %p216
      $region62: #{glow_density_forward.1} parent=59 // pred_check_branch
        %1539 = sbr.rel (%p1537) target = $region64
      $region63: #{glow_density_forward.1} parent=59 // pred_region
        %p1540 = scmp.lt.s32.totalorder %s20, 1
        %s1541 = scalar_select %p1540, %s20, 1
        %s1542 = smul.addr %s1541, 2
        %s1543 = smul.addr %s1542, 8
        %s1544 = scalar_lea.vmem %s8, %s1543
      $region64: #{glow_density_forward.1} parent=59 // pred_fallthru
        _
    $region60: #{glow_density_forward.1} parent=5 // pred_fallthru
      _
  $region6: #{glow_density_forward.1} parent=0 // loop_footer
    %s18 = sadd.s32 1, %s14
  $region7: #{glow_density_forward.1} parent=0 // loop_footer_branch
    %13 = sbr.rel target = $region3
  $region8: #{glow_density_forward.1} parent=0 // loop_exit
    _

</llo_original>
